<compile_context>
chip_gen: v5e
topology: v5e:2x2
jax: 0.10.0
libtpu: 0.0.40
codegen_flags: <defaults>
</compile_context>

<pallas_src>
import functools
import math

import jax
import jax.numpy as jnp
import numpy as np
from jax import lax
from jax.experimental import pallas as pl
from jax.experimental.pallas import tpu as pltpu

EPS = 1e-5  # nn.BatchNorm2d default eps


# --------------------------------------------------------------------------- #
# In-kernel grouped conv: accumulate k*k taps as (Cout, Cin) @ (Cin, P) matmuls.
# --------------------------------------------------------------------------- #
def _conv_accum(x_ref, wt_ref, *, k, s, d, OH, OW, Wp, LW):
    """Compute y = grouped conv for one image, shape (Cout, OH*LW), f32.

    s == 1 fast path: x_ref is (Cin, Hp*Wp + (k-1)*d) — the padded image flattened over
    (H, W) plus spare lanes — so tap (kh, kw) is the contiguous lane slice
    [o, o + OH*Wp) with o = (kh*Wp + kw)*d.  Columns w >= OW of each output row are
    don't-care (masked in the stats pass, stripped in the wrapper after the apply pass).

    s > 1 generic path: x_ref is (Cin, Hp, Wp); taps are strided slices + reshape.
    """
    Cout, Cin = wt_ref.shape[1], wt_ref.shape[2]
    P = OH * LW
    if s != 1:
        x_img = x_ref[...]  # (Cin, Hp, Wp)
    y = jnp.zeros((Cout, P), dtype=jnp.float32)
    for kh in range(k):
        for kw in range(k):
            t = kh * k + kw
            if s == 1:
                o = (kh * Wp + kw) * d
                slab = x_ref[:, o:o + P]                      # (Cin, P), no reshape
            else:
                # TODO(synk): strided (s > 1) path relies on in-kernel strided slice +
                # reshape; correct but untuned (the tested config has s == 1).
                win = lax.slice(
                    x_img, (0, kh * d, kw * d),
                    (Cin, kh * d + s * (OH - 1) + 1, kw * d + s * (OW - 1) + 1),
                    (1, s, s))                                 # (Cin, OH, OW)
                slab = win.reshape(Cin, P)
            y = y + jnp.dot(wt_ref[t], slab, preferred_element_type=jnp.float32)
    return y


def _stats_kernel(x_ref, wt_ref, mask_ref, psum_ref, *, k, s, d, OH, OW, Wp, LW):
    # Pass 1: conv + per-image per-channel sum / sum-of-squares (f32 accumulation).
    y = _conv_accum(x_ref, wt_ref, k=k, s=s, d=d, OH=OH, OW=OW, Wp=Wp, LW=LW)
    yv = y * mask_ref[...]                         # zero out the don't-care columns
    psum_ref[:, 0:1] = jnp.sum(yv, axis=1, keepdims=True)
    psum_ref[:, 1:2] = jnp.sum(yv * yv, axis=1, keepdims=True)


def _apply_kernel(x_ref, wt_ref, affine_ref, o_ref, *, k, s, d, OH, OW, Wp, LW):
    # Pass 2: recompute the conv (cheaper than a y round-trip through HBM here),
    # apply folded BN (y*scale + shift) and SiLU, store lane-dense (Cout, OH*LW).
    y = _conv_accum(x_ref, wt_ref, k=k, s=s, d=d, OH=OH, OW=OW, Wp=Wp, LW=LW)
    scale = affine_ref[:, 0:1]                     # (Cout, 1), broadcasts over lanes
    shift = affine_ref[:, 1:2]
    z = y * scale + shift
    o_ref[...] = z / (1.0 + jnp.exp(-z))           # SiLU = z * sigmoid(z)


# --------------------------------------------------------------------------- #
# Wrapper
# --------------------------------------------------------------------------- #
def fdconv_forward(x, weight, bias, gamma, beta, *, k, p, s, d):
    """FDConv forward: grouped Conv2d -> BatchNorm2d (batch stats) -> SiLU.

    x: (N, Cin, H, W) f32 NCHW; weight: (Cout, Cin//G, k, k); bias/gamma/beta: (Cout,).
    Returns (N, Cout, OH, OW) f32.
    """
    N, Cin, H, W = x.shape
    Cout = weight.shape[0]
    G = math.gcd(Cin, Cout)
    cin_g, cout_g = Cin // G, Cout // G
    assert weight.shape == (Cout, cin_g, k, k)
    OH = (H + 2 * p - d * (k - 1) - 1) // s + 1
    OW = (W + 2 * p - d * (k - 1) - 1) // s + 1
    Hp, Wp = H + 2 * p, W + 2 * p
    M = N * OH * OW

    # Conv bias cancels exactly under training-mode BatchNorm (a per-channel shift drops
    # out of y - mean and leaves the variance unchanged) -> skip the add and its DMA.
    del bias

    # Per-tap block-diagonal weights wt[t, co, ci]: fuses all groups into a single
    # (Cout, Cin) x (Cin, P) matmul per tap, in PyTorch grouped-conv channel order.
    w_taps = jnp.transpose(weight.astype(jnp.float32), (2, 3, 0, 1)).reshape(k * k, Cout, cin_g)
    group_mask = ((jnp.arange(Cin)[None, :] // cin_g) ==
                  (jnp.arange(Cout)[:, None] // cout_g)).astype(jnp.float32)
    wt = jnp.tile(w_taps, (1, 1, G)) * group_mask[None]          # (k*k, Cout, Cin)

    xp = jnp.pad(x.astype(jnp.float32), ((0, 0), (0, 0), (p, p), (p, p)))
    if s == 1:
        # Flatten (Hp, Wp) and add (k-1)*d spare lanes so each tap window is one
        # contiguous lane slice -> no im2col in HBM, no in-kernel reshape.
        LW = Wp
        extra = (k - 1) * d
        Lx = Hp * Wp + extra
        x_in = jnp.pad(xp.reshape(N, Cin, Hp * Wp), ((0, 0), (0, 0), (0, extra)))
        x_spec = pl.BlockSpec((pl.Squeezed(), Cin, Lx), lambda n: (n, 0, 0))
    else:
        LW = OW
        Lx = Hp * Wp
        x_in = xp
        x_spec = pl.BlockSpec((pl.Squeezed(), Cin, Hp, Wp), lambda n: (n, 0, 0, 0))
    P = OH * LW

    wt_spec = pl.BlockSpec((k * k, Cout, Cin), lambda n: (0, 0, 0))

    # Valid-column mask for the "wide" (OH, Wp) layout (all ones when LW == OW).
    vmask = jnp.tile((jnp.arange(LW) < OW).astype(jnp.float32), (OH,)).reshape(1, P)

    kparams = dict(k=k, s=s, d=d, OH=OH, OW=OW, Wp=Wp, LW=LW)
    # Explicit VMEM budget (double-buffered blocks + in-kernel f32 accumulators),
    # clamped so the same code stays within v7x's 64 MiB as well as v5e/v6e.
    block_bytes = 4 * (Cin * Lx + k * k * Cout * Cin + 2 * Cout * P + Cin * P + P)
    vmem_limit = int(min(64 * 1024 * 1024, max(16 * 1024 * 1024, 8 * block_bytes)))
    cparams = pltpu.CompilerParams(
        dimension_semantics=("parallel",),   # images are independent -> megacore split
        vmem_limit_bytes=vmem_limit,
    )

    # ---- pass 1: conv + per-image partial (sum, sumsq) per channel -------------------
    psum = pl.pallas_call(
        functools.partial(_stats_kernel, **kparams),
        out_shape=jax.ShapeDtypeStruct((N, Cout, 2), jnp.float32),
        grid=(N,),
        in_specs=[x_spec, wt_spec, pl.BlockSpec((1, P), lambda n: (0, 0))],
        out_specs=pl.BlockSpec((pl.Squeezed(), Cout, 2), lambda n: (n, 0, 0)),
        compiler_params=cparams,
    )(x_in, wt, vmask)

    # ---- tiny cross-image reduction + BN folding (f32, plain JAX) --------------------
    tot = jnp.sum(psum, axis=0)                                  # (Cout, 2)
    mean = tot[:, 0] / M
    var = jnp.maximum(tot[:, 1] / M - mean * mean, 0.0)          # biased batch variance
    scale = gamma.astype(jnp.float32) * lax.rsqrt(var + EPS)
    shift = beta.astype(jnp.float32) - mean * scale
    affine = jnp.stack([scale, shift], axis=1)                   # (Cout, 2)
    # TODO(synk): BN running_mean/running_var momentum updates (training-time side
    # effect, not part of the returned tensor) are not materialized.

    # ---- pass 2: recompute conv, apply folded BN + SiLU, lane-dense store ------------
    out_wide = pl.pallas_call(
        functools.partial(_apply_kernel, **kparams),
        out_shape=jax.ShapeDtypeStruct((N, Cout, P), jnp.float32),
        grid=(N,),
        in_specs=[x_spec, wt_spec, pl.BlockSpec((Cout, 2), lambda n: (0, 0))],
        out_specs=pl.BlockSpec((pl.Squeezed(), Cout, P), lambda n: (n, 0, 0)),
        compiler_params=cparams,
    )(x_in, wt, affine)

    # (N, Cout, OH*LW) -> NCHW: free reshape + strip of the LW-OW don't-care columns.
    out = out_wide.reshape(N, Cout, OH, LW)[:, :, :, :OW]
    return out


# --------------------------------------------------------------------------- #
# Pure-JAX reference reproducing the PyTorch module forward (including the bias,
# to demonstrate that dropping it in the kernel changes nothing).
# --------------------------------------------------------------------------- #
def _reference(x, weight, bias, gamma, beta, *, k, p, s, d):
    Cin = x.shape[1]
    Cout = weight.shape[0]
    G = math.gcd(Cin, Cout)
    y = lax.conv_general_dilated(
        x, weight, window_strides=(s, s), padding=[(p, p), (p, p)],
        rhs_dilation=(d, d), dimension_numbers=("NCHW", "OIHW", "NCHW"),
        feature_group_count=G,
    ) + bias.reshape(1, -1, 1, 1)
    mean = y.mean(axis=(0, 2, 3), keepdims=True)
    var = ((y - mean) ** 2).mean(axis=(0, 2, 3), keepdims=True)
    z = (y - mean) / jnp.sqrt(var + EPS) * gamma.reshape(1, -1, 1, 1) + beta.reshape(1, -1, 1, 1)
    return z * jax.nn.sigmoid(z)


if __name__ == "__main__":
    # Module config: FDConv(in_c=4, out_c=8, k=3, p=1, s=1, d=1) -> groups = gcd(4, 8) = 4
    N, in_c, out_c, H, W = 2, 4, 8, 16, 16
    k, p, s, d = 3, 1, 1, 1
    G = math.gcd(in_c, out_c)

    key = jax.random.PRNGKey(0)
    kx, kw_, kb = jax.random.split(key, 3)
    x = jax.random.normal(kx, (N, in_c, H, W), dtype=jnp.float32)

    fan_in = (in_c // G) * k * k
    weight = jax.random.normal(kw_, (out_c, in_c // G, k, k), dtype=jnp.float32) / math.sqrt(fan_in)
    bias = jax.random.normal(kb, (out_c,), dtype=jnp.float32) * 0.1
    gamma = jnp.ones((out_c,), dtype=jnp.float32)   # nn.BatchNorm2d default init
    beta = jnp.zeros((out_c,), dtype=jnp.float32)

    fwd = jax.jit(functools.partial(fdconv_forward, k=k, p=p, s=s, d=d))
    out = jax.block_until_ready(fwd(x, weight, bias, gamma, beta))

    ref = _reference(x, weight, bias, gamma, beta, k=k, p=p, s=s, d=d)
    # Slightly looser tolerance than before: variance is E[y^2] - mean^2 in f32 here
    # (vs the centered form in the reference) and the bias add is elided (it cancels).
    np.testing.assert_allclose(np.asarray(out), np.asarray(ref), atol=1e-3, rtol=1e-3)

    print("KERNEL_OK")
</pallas_src>

<mosaic_0001>
module attributes {stable_mosaic.version = 11 : i64} {
  func.func @_stats_kernel(%arg0: i32, %arg1: memref<1x4x326xf32, #tpu.memory_space<vmem>>, %arg2: memref<9x8x4xf32, #tpu.memory_space<vmem>>, %arg3: memref<1x288xf32, #tpu.memory_space<vmem>>, %arg4: memref<1x8x2xf32, #tpu.memory_space<vmem>>) attributes {dimension_semantics = [#tpu.dimension_semantics<parallel>], iteration_bounds = array<i64: 2>, scalar_prefetch = 0 : i64, scratch_operands = 0 : i64, tpu.core_type = #tpu.core_type<tc>, window_params = [{transform_indices = @transform_0, window_bounds = array<i64: 1, 4, 326>}, {pipeline_mode = #tpu.pipeline_mode<synchronous>, transform_indices = @transform_1, window_bounds = array<i64: 9, 8, 4>}, {pipeline_mode = #tpu.pipeline_mode<synchronous>, transform_indices = @transform_2, window_bounds = array<i64: 1, 288>}, {transform_indices = @transform_3, window_bounds = array<i64: 1, 8, 2>}]} {
    %cst = arith.constant 0.000000e+00 : f32
    %0 = vector.broadcast %cst : f32 to vector<8x288xf32>
    %c0 = arith.constant 0 : index
    %c0_0 = arith.constant 0 : index
    %c0_1 = arith.constant 0 : index
    %1 = vector.load %arg1[%c0, %c0_0, %c0_1] : memref<1x4x326xf32, #tpu.memory_space<vmem>>, vector<1x4x288xf32>
    %2 = vector.shape_cast %1 : vector<1x4x288xf32> to vector<4x288xf32>
    %c0_2 = arith.constant 0 : index
    %c0_3 = arith.constant 0 : index
    %c0_4 = arith.constant 0 : index
    %3 = vector.load %arg2[%c0_2, %c0_3, %c0_4] : memref<9x8x4xf32, #tpu.memory_space<vmem>>, vector<1x8x4xf32>
    %4 = vector.shape_cast %3 : vector<1x8x4xf32> to vector<8x4xf32>
    %cst_5 = arith.constant dense<0.000000e+00> : vector<8x288xf32>
    %5 = tpu.matmul %4, %2, %cst_5 {dimension_numbers = #tpu.dot_dimension_numbers<[1], [0], [0], [1], [0, 0, 1, 1], [], []>} : vector<8x4xf32>, vector<4x288xf32>, vector<8x288xf32> -> vector<8x288xf32>
    %6 = arith.addf %0, %5 : vector<8x288xf32>
    %c0_6 = arith.constant 0 : index
    %c0_7 = arith.constant 0 : index
    %c1 = arith.constant 1 : index
    %7 = vector.load %arg1[%c0_6, %c0_7, %c1] : memref<1x4x326xf32, #tpu.memory_space<vmem>>, vector<1x4x288xf32>
    %8 = vector.shape_cast %7 : vector<1x4x288xf32> to vector<4x288xf32>
    %c1_8 = arith.constant 1 : index
    %c0_9 = arith.constant 0 : index
    %c0_10 = arith.constant 0 : index
    %9 = vector.load %arg2[%c1_8, %c0_9, %c0_10] : memref<9x8x4xf32, #tpu.memory_space<vmem>>, vector<1x8x4xf32>
    %10 = vector.shape_cast %9 : vector<1x8x4xf32> to vector<8x4xf32>
    %cst_11 = arith.constant dense<0.000000e+00> : vector<8x288xf32>
    %11 = tpu.matmul %10, %8, %cst_11 {dimension_numbers = #tpu.dot_dimension_numbers<[1], [0], [0], [1], [0, 0, 1, 1], [], []>} : vector<8x4xf32>, vector<4x288xf32>, vector<8x288xf32> -> vector<8x288xf32>
    %12 = arith.addf %6, %11 : vector<8x288xf32>
    %c0_12 = arith.constant 0 : index
    %c0_13 = arith.constant 0 : index
    %c2 = arith.constant 2 : index
    %13 = vector.load %arg1[%c0_12, %c0_13, %c2] : memref<1x4x326xf32, #tpu.memory_space<vmem>>, vector<1x4x288xf32>
    %14 = vector.shape_cast %13 : vector<1x4x288xf32> to vector<4x288xf32>
    %c2_14 = arith.constant 2 : index
    %c0_15 = arith.constant 0 : index
    %c0_16 = arith.constant 0 : index
    %15 = vector.load %arg2[%c2_14, %c0_15, %c0_16] : memref<9x8x4xf32, #tpu.memory_space<vmem>>, vector<1x8x4xf32>
    %16 = vector.shape_cast %15 : vector<1x8x4xf32> to vector<8x4xf32>
    %cst_17 = arith.constant dense<0.000000e+00> : vector<8x288xf32>
    %17 = tpu.matmul %16, %14, %cst_17 {dimension_numbers = #tpu.dot_dimension_numbers<[1], [0], [0], [1], [0, 0, 1, 1], [], []>} : vector<8x4xf32>, vector<4x288xf32>, vector<8x288xf32> -> vector<8x288xf32>
    %18 = arith.addf %12, %17 : vector<8x288xf32>
    %c0_18 = arith.constant 0 : index
    %c0_19 = arith.constant 0 : index
    %c18 = arith.constant 18 : index
    %19 = vector.load %arg1[%c0_18, %c0_19, %c18] : memref<1x4x326xf32, #tpu.memory_space<vmem>>, vector<1x4x288xf32>
    %20 = vector.shape_cast %19 : vector<1x4x288xf32> to vector<4x288xf32>
    %c3 = arith.constant 3 : index
    %c0_20 = arith.constant 0 : index
    %c0_21 = arith.constant 0 : index
    %21 = vector.load %arg2[%c3, %c0_20, %c0_21] : memref<9x8x4xf32, #tpu.memory_space<vmem>>, vector<1x8x4xf32>
    %22 = vector.shape_cast %21 : vector<1x8x4xf32> to vector<8x4xf32>
    %cst_22 = arith.constant dense<0.000000e+00> : vector<8x288xf32>
    %23 = tpu.matmul %22, %20, %cst_22 {dimension_numbers = #tpu.dot_dimension_numbers<[1], [0], [0], [1], [0, 0, 1, 1], [], []>} : vector<8x4xf32>, vector<4x288xf32>, vector<8x288xf32> -> vector<8x288xf32>
    %24 = arith.addf %18, %23 : vector<8x288xf32>
    %c0_23 = arith.constant 0 : index
    %c0_24 = arith.constant 0 : index
    %c19 = arith.constant 19 : index
    %25 = vector.load %arg1[%c0_23, %c0_24, %c19] : memref<1x4x326xf32, #tpu.memory_space<vmem>>, vector<1x4x288xf32>
    %26 = vector.shape_cast %25 : vector<1x4x288xf32> to vector<4x288xf32>
    %c4 = arith.constant 4 : index
    %c0_25 = arith.constant 0 : index
    %c0_26 = arith.constant 0 : index
    %27 = vector.load %arg2[%c4, %c0_25, %c0_26] : memref<9x8x4xf32, #tpu.memory_space<vmem>>, vector<1x8x4xf32>
    %28 = vector.shape_cast %27 : vector<1x8x4xf32> to vector<8x4xf32>
    %cst_27 = arith.constant dense<0.000000e+00> : vector<8x288xf32>
    %29 = tpu.matmul %28, %26, %cst_27 {dimension_numbers = #tpu.dot_dimension_numbers<[1], [0], [0], [1], [0, 0, 1, 1], [], []>} : vector<8x4xf32>, vector<4x288xf32>, vector<8x288xf32> -> vector<8x288xf32>
    %30 = arith.addf %24, %29 : vector<8x288xf32>
    %c0_28 = arith.constant 0 : index
    %c0_29 = arith.constant 0 : index
    %c20 = arith.constant 20 : index
    %31 = vector.load %arg1[%c0_28, %c0_29, %c20] : memref<1x4x326xf32, #tpu.memory_space<vmem>>, vector<1x4x288xf32>
    %32 = vector.shape_cast %31 : vector<1x4x288xf32> to vector<4x288xf32>
    %c5 = arith.constant 5 : index
    %c0_30 = arith.constant 0 : index
    %c0_31 = arith.constant 0 : index
    %33 = vector.load %arg2[%c5, %c0_30, %c0_31] : memref<9x8x4xf32, #tpu.memory_space<vmem>>, vector<1x8x4xf32>
    %34 = vector.shape_cast %33 : vector<1x8x4xf32> to vector<8x4xf32>
    %cst_32 = arith.constant dense<0.000000e+00> : vector<8x288xf32>
    %35 = tpu.matmul %34, %32, %cst_32 {dimension_numbers = #tpu.dot_dimension_numbers<[1], [0], [0], [1], [0, 0, 1, 1], [], []>} : vector<8x4xf32>, vector<4x288xf32>, vector<8x288xf32> -> vector<8x288xf32>
    %36 = arith.addf %30, %35 : vector<8x288xf32>
    %c0_33 = arith.constant 0 : index
    %c0_34 = arith.constant 0 : index
    %c36 = arith.constant 36 : index
    %37 = vector.load %arg1[%c0_33, %c0_34, %c36] : memref<1x4x326xf32, #tpu.memory_space<vmem>>, vector<1x4x288xf32>
    %38 = vector.shape_cast %37 : vector<1x4x288xf32> to vector<4x288xf32>
    %c6 = arith.constant 6 : index
    %c0_35 = arith.constant 0 : index
    %c0_36 = arith.constant 0 : index
    %39 = vector.load %arg2[%c6, %c0_35, %c0_36] : memref<9x8x4xf32, #tpu.memory_space<vmem>>, vector<1x8x4xf32>
    %40 = vector.shape_cast %39 : vector<1x8x4xf32> to vector<8x4xf32>
    %cst_37 = arith.constant dense<0.000000e+00> : vector<8x288xf32>
    %41 = tpu.matmul %40, %38, %cst_37 {dimension_numbers = #tpu.dot_dimension_numbers<[1], [0], [0], [1], [0, 0, 1, 1], [], []>} : vector<8x4xf32>, vector<4x288xf32>, vector<8x288xf32> -> vector<8x288xf32>
    %42 = arith.addf %36, %41 : vector<8x288xf32>
    %c0_38 = arith.constant 0 : index
    %c0_39 = arith.constant 0 : index
    %c37 = arith.constant 37 : index
    %43 = vector.load %arg1[%c0_38, %c0_39, %c37] : memref<1x4x326xf32, #tpu.memory_space<vmem>>, vector<1x4x288xf32>
    %44 = vector.shape_cast %43 : vector<1x4x288xf32> to vector<4x288xf32>
    %c7 = arith.constant 7 : index
    %c0_40 = arith.constant 0 : index
    %c0_41 = arith.constant 0 : index
    %45 = vector.load %arg2[%c7, %c0_40, %c0_41] : memref<9x8x4xf32, #tpu.memory_space<vmem>>, vector<1x8x4xf32>
    %46 = vector.shape_cast %45 : vector<1x8x4xf32> to vector<8x4xf32>
    %cst_42 = arith.constant dense<0.000000e+00> : vector<8x288xf32>
    %47 = tpu.matmul %46, %44, %cst_42 {dimension_numbers = #tpu.dot_dimension_numbers<[1], [0], [0], [1], [0, 0, 1, 1], [], []>} : vector<8x4xf32>, vector<4x288xf32>, vector<8x288xf32> -> vector<8x288xf32>
    %48 = arith.addf %42, %47 : vector<8x288xf32>
    %c0_43 = arith.constant 0 : index
    %c0_44 = arith.constant 0 : index
    %c38 = arith.constant 38 : index
    %49 = vector.load %arg1[%c0_43, %c0_44, %c38] : memref<1x4x326xf32, #tpu.memory_space<vmem>>, vector<1x4x288xf32>
    %50 = vector.shape_cast %49 : vector<1x4x288xf32> to vector<4x288xf32>
    %c8 = arith.constant 8 : index
    %c0_45 = arith.constant 0 : index
    %c0_46 = arith.constant 0 : index
    %51 = vector.load %arg2[%c8, %c0_45, %c0_46] : memref<9x8x4xf32, #tpu.memory_space<vmem>>, vector<1x8x4xf32>
    %52 = vector.shape_cast %51 : vector<1x8x4xf32> to vector<8x4xf32>
    %cst_47 = arith.constant dense<0.000000e+00> : vector<8x288xf32>
    %53 = tpu.matmul %52, %50, %cst_47 {dimension_numbers = #tpu.dot_dimension_numbers<[1], [0], [0], [1], [0, 0, 1, 1], [], []>} : vector<8x4xf32>, vector<4x288xf32>, vector<8x288xf32> -> vector<8x288xf32>
    %54 = arith.addf %48, %53 : vector<8x288xf32>
    %c0_48 = arith.constant 0 : index
    %c0_49 = arith.constant 0 : index
    %55 = vector.load %arg3[%c0_48, %c0_49] : memref<1x288xf32, #tpu.memory_space<vmem>>, vector<1x288xf32>
    %56 = vector.broadcast %55 : vector<1x288xf32> to vector<8x288xf32>
    %57 = arith.mulf %54, %56 : vector<8x288xf32>
    %cst_50 = arith.constant dense<0.000000e+00> : vector<8xf32>
    %58 = vector.multi_reduction <add>, %57, %cst_50 [1] : vector<8x288xf32> to vector<8xf32>
    %59 = vector.shape_cast %58 : vector<8xf32> to vector<8x1xf32>
    %c0_51 = arith.constant 0 : index
    %c0_52 = arith.constant 0 : index
    %c0_53 = arith.constant 0 : index
    %60 = vector.load %arg4[%c0_51, %c0_52, %c0_53] : memref<1x8x2xf32, #tpu.memory_space<vmem>>, vector<1x8x1xf32>
    %61 = vector.shape_cast %60 : vector<1x8x1xf32> to vector<8x1xf32>
    %62 = vector.shape_cast %59 : vector<8x1xf32> to vector<1x8x1xf32>
    tpu.vector_store %arg4[%c0_51, %c0_52, %c0_53], %62 {strides = array<i32>} : memref<1x8x2xf32, #tpu.memory_space<vmem>>, vector<1x8x1xf32>,
    %63 = arith.mulf %57, %57 : vector<8x288xf32>
    %cst_54 = arith.constant dense<0.000000e+00> : vector<8xf32>
    %64 = vector.multi_reduction <add>, %63, %cst_54 [1] : vector<8x288xf32> to vector<8xf32>
    %65 = vector.shape_cast %64 : vector<8xf32> to vector<8x1xf32>
    %c0_55 = arith.constant 0 : index
    %c0_56 = arith.constant 0 : index
    %c1_57 = arith.constant 1 : index
    %66 = vector.load %arg4[%c0_55, %c0_56, %c1_57] : memref<1x8x2xf32, #tpu.memory_space<vmem>>, vector<1x8x1xf32>
    %67 = vector.shape_cast %66 : vector<1x8x1xf32> to vector<8x1xf32>
    %68 = vector.shape_cast %65 : vector<8x1xf32> to vector<1x8x1xf32>
    tpu.vector_store %arg4[%c0_55, %c0_56, %c1_57], %68 {strides = array<i32>} : memref<1x8x2xf32, #tpu.memory_space<vmem>>, vector<1x8x1xf32>,
    return
  }
  func.func @transform_0(%arg0: i32) -> (i32, i32, i32) {
    %c0_i32 = arith.constant 0 : i32
    %c0_i32_0 = arith.constant 0 : i32
    %c0_i32_1 = arith.constant 0 : i32
    return %arg0, %c0_i32, %c0_i32_0 : i32, i32, i32
  }
  func.func @transform_1(%arg0: i32) -> (i32, i32, i32) {
    %c0_i32 = arith.constant 0 : i32
    %c0_i32_0 = arith.constant 0 : i32
    %c0_i32_1 = arith.constant 0 : i32
    %c0_i32_2 = arith.constant 0 : i32
    return %c0_i32, %c0_i32_0, %c0_i32_1 : i32, i32, i32
  }
  func.func @transform_2(%arg0: i32) -> (i32, i32) {
    %c0_i32 = arith.constant 0 : i32
    %c0_i32_0 = arith.constant 0 : i32
    %c0_i32_1 = arith.constant 0 : i32
    return %c0_i32, %c0_i32_0 : i32, i32
  }
  func.func @transform_3(%arg0: i32) -> (i32, i32, i32) {
    %c0_i32 = arith.constant 0 : i32
    %c0_i32_0 = arith.constant 0 : i32
    %c0_i32_1 = arith.constant 0 : i32
    return %arg0, %c0_i32, %c0_i32_0 : i32, i32, i32
  }
}

module attributes {stable_mosaic.version = 11 : i64} {
  func.func @_apply_kernel(%arg0: i32, %arg1: memref<1x4x326xf32, #tpu.memory_space<vmem>>, %arg2: memref<9x8x4xf32, #tpu.memory_space<vmem>>, %arg3: memref<8x2xf32, #tpu.memory_space<vmem>>, %arg4: memref<1x8x288xf32, #tpu.memory_space<vmem>>) attributes {dimension_semantics = [#tpu.dimension_semantics<parallel>], iteration_bounds = array<i64: 2>, scalar_prefetch = 0 : i64, scratch_operands = 0 : i64, tpu.core_type = #tpu.core_type<tc>, window_params = [{transform_indices = @transform_0, window_bounds = array<i64: 1, 4, 326>}, {pipeline_mode = #tpu.pipeline_mode<synchronous>, transform_indices = @transform_1, window_bounds = array<i64: 9, 8, 4>}, {pipeline_mode = #tpu.pipeline_mode<synchronous>, transform_indices = @transform_2, window_bounds = array<i64: 8, 2>}, {transform_indices = @transform_3, window_bounds = array<i64: 1, 8, 288>}]} {
    %cst = arith.constant 0.000000e+00 : f32
    %0 = vector.broadcast %cst : f32 to vector<8x288xf32>
    %c0 = arith.constant 0 : index
    %c0_0 = arith.constant 0 : index
    %c0_1 = arith.constant 0 : index
    %1 = vector.load %arg1[%c0, %c0_0, %c0_1] : memref<1x4x326xf32, #tpu.memory_space<vmem>>, vector<1x4x288xf32>
    %2 = vector.shape_cast %1 : vector<1x4x288xf32> to vector<4x288xf32>
    %c0_2 = arith.constant 0 : index
    %c0_3 = arith.constant 0 : index
    %c0_4 = arith.constant 0 : index
    %3 = vector.load %arg2[%c0_2, %c0_3, %c0_4] : memref<9x8x4xf32, #tpu.memory_space<vmem>>, vector<1x8x4xf32>
    %4 = vector.shape_cast %3 : vector<1x8x4xf32> to vector<8x4xf32>
    %cst_5 = arith.constant dense<0.000000e+00> : vector<8x288xf32>
    %5 = tpu.matmul %4, %2, %cst_5 {dimension_numbers = #tpu.dot_dimension_numbers<[1], [0], [0], [1], [0, 0, 1, 1], [], []>} : vector<8x4xf32>, vector<4x288xf32>, vector<8x288xf32> -> vector<8x288xf32>
    %6 = arith.addf %0, %5 : vector<8x288xf32>
    %c0_6 = arith.constant 0 : index
    %c0_7 = arith.constant 0 : index
    %c1 = arith.constant 1 : index
    %7 = vector.load %arg1[%c0_6, %c0_7, %c1] : memref<1x4x326xf32, #tpu.memory_space<vmem>>, vector<1x4x288xf32>
    %8 = vector.shape_cast %7 : vector<1x4x288xf32> to vector<4x288xf32>
    %c1_8 = arith.constant 1 : index
    %c0_9 = arith.constant 0 : index
    %c0_10 = arith.constant 0 : index
    %9 = vector.load %arg2[%c1_8, %c0_9, %c0_10] : memref<9x8x4xf32, #tpu.memory_space<vmem>>, vector<1x8x4xf32>
    %10 = vector.shape_cast %9 : vector<1x8x4xf32> to vector<8x4xf32>
    %cst_11 = arith.constant dense<0.000000e+00> : vector<8x288xf32>
    %11 = tpu.matmul %10, %8, %cst_11 {dimension_numbers = #tpu.dot_dimension_numbers<[1], [0], [0], [1], [0, 0, 1, 1], [], []>} : vector<8x4xf32>, vector<4x288xf32>, vector<8x288xf32> -> vector<8x288xf32>
    %12 = arith.addf %6, %11 : vector<8x288xf32>
    %c0_12 = arith.constant 0 : index
    %c0_13 = arith.constant 0 : index
    %c2 = arith.constant 2 : index
    %13 = vector.load %arg1[%c0_12, %c0_13, %c2] : memref<1x4x326xf32, #tpu.memory_space<vmem>>, vector<1x4x288xf32>
    %14 = vector.shape_cast %13 : vector<1x4x288xf32> to vector<4x288xf32>
    %c2_14 = arith.constant 2 : index
    %c0_15 = arith.constant 0 : index
    %c0_16 = arith.constant 0 : index
    %15 = vector.load %arg2[%c2_14, %c0_15, %c0_16] : memref<9x8x4xf32, #tpu.memory_space<vmem>>, vector<1x8x4xf32>
    %16 = vector.shape_cast %15 : vector<1x8x4xf32> to vector<8x4xf32>
    %cst_17 = arith.constant dense<0.000000e+00> : vector<8x288xf32>
    %17 = tpu.matmul %16, %14, %cst_17 {dimension_numbers = #tpu.dot_dimension_numbers<[1], [0], [0], [1], [0, 0, 1, 1], [], []>} : vector<8x4xf32>, vector<4x288xf32>, vector<8x288xf32> -> vector<8x288xf32>
    %18 = arith.addf %12, %17 : vector<8x288xf32>
    %c0_18 = arith.constant 0 : index
    %c0_19 = arith.constant 0 : index
    %c18 = arith.constant 18 : index
    %19 = vector.load %arg1[%c0_18, %c0_19, %c18] : memref<1x4x326xf32, #tpu.memory_space<vmem>>, vector<1x4x288xf32>
    %20 = vector.shape_cast %19 : vector<1x4x288xf32> to vector<4x288xf32>
    %c3 = arith.constant 3 : index
    %c0_20 = arith.constant 0 : index
    %c0_21 = arith.constant 0 : index
    %21 = vector.load %arg2[%c3, %c0_20, %c0_21] : memref<9x8x4xf32, #tpu.memory_space<vmem>>, vector<1x8x4xf32>
    %22 = vector.shape_cast %21 : vector<1x8x4xf32> to vector<8x4xf32>
    %cst_22 = arith.constant dense<0.000000e+00> : vector<8x288xf32>
    %23 = tpu.matmul %22, %20, %cst_22 {dimension_numbers = #tpu.dot_dimension_numbers<[1], [0], [0], [1], [0, 0, 1, 1], [], []>} : vector<8x4xf32>, vector<4x288xf32>, vector<8x288xf32> -> vector<8x288xf32>
    %24 = arith.addf %18, %23 : vector<8x288xf32>
    %c0_23 = arith.constant 0 : index
    %c0_24 = arith.constant 0 : index
    %c19 = arith.constant 19 : index
    %25 = vector.load %arg1[%c0_23, %c0_24, %c19] : memref<1x4x326xf32, #tpu.memory_space<vmem>>, vector<1x4x288xf32>
    %26 = vector.shape_cast %25 : vector<1x4x288xf32> to vector<4x288xf32>
    %c4 = arith.constant 4 : index
    %c0_25 = arith.constant 0 : index
    %c0_26 = arith.constant 0 : index
    %27 = vector.load %arg2[%c4, %c0_25, %c0_26] : memref<9x8x4xf32, #tpu.memory_space<vmem>>, vector<1x8x4xf32>
    %28 = vector.shape_cast %27 : vector<1x8x4xf32> to vector<8x4xf32>
    %cst_27 = arith.constant dense<0.000000e+00> : vector<8x288xf32>
    %29 = tpu.matmul %28, %26, %cst_27 {dimension_numbers = #tpu.dot_dimension_numbers<[1], [0], [0], [1], [0, 0, 1, 1], [], []>} : vector<8x4xf32>, vector<4x288xf32>, vector<8x288xf32> -> vector<8x288xf32>
    %30 = arith.addf %24, %29 : vector<8x288xf32>
    %c0_28 = arith.constant 0 : index
    %c0_29 = arith.constant 0 : index
    %c20 = arith.constant 20 : index
    %31 = vector.load %arg1[%c0_28, %c0_29, %c20] : memref<1x4x326xf32, #tpu.memory_space<vmem>>, vector<1x4x288xf32>
    %32 = vector.shape_cast %31 : vector<1x4x288xf32> to vector<4x288xf32>
    %c5 = arith.constant 5 : index
    %c0_30 = arith.constant 0 : index
    %c0_31 = arith.constant 0 : index
    %33 = vector.load %arg2[%c5, %c0_30, %c0_31] : memref<9x8x4xf32, #tpu.memory_space<vmem>>, vector<1x8x4xf32>
    %34 = vector.shape_cast %33 : vector<1x8x4xf32> to vector<8x4xf32>
    %cst_32 = arith.constant dense<0.000000e+00> : vector<8x288xf32>
    %35 = tpu.matmul %34, %32, %cst_32 {dimension_numbers = #tpu.dot_dimension_numbers<[1], [0], [0], [1], [0, 0, 1, 1], [], []>} : vector<8x4xf32>, vector<4x288xf32>, vector<8x288xf32> -> vector<8x288xf32>
    %36 = arith.addf %30, %35 : vector<8x288xf32>
    %c0_33 = arith.constant 0 : index
    %c0_34 = arith.constant 0 : index
    %c36 = arith.constant 36 : index
    %37 = vector.load %arg1[%c0_33, %c0_34, %c36] : memref<1x4x326xf32, #tpu.memory_space<vmem>>, vector<1x4x288xf32>
    %38 = vector.shape_cast %37 : vector<1x4x288xf32> to vector<4x288xf32>
    %c6 = arith.constant 6 : index
    %c0_35 = arith.constant 0 : index
    %c0_36 = arith.constant 0 : index
    %39 = vector.load %arg2[%c6, %c0_35, %c0_36] : memref<9x8x4xf32, #tpu.memory_space<vmem>>, vector<1x8x4xf32>
    %40 = vector.shape_cast %39 : vector<1x8x4xf32> to vector<8x4xf32>
    %cst_37 = arith.constant dense<0.000000e+00> : vector<8x288xf32>
    %41 = tpu.matmul %40, %38, %cst_37 {dimension_numbers = #tpu.dot_dimension_numbers<[1], [0], [0], [1], [0, 0, 1, 1], [], []>} : vector<8x4xf32>, vector<4x288xf32>, vector<8x288xf32> -> vector<8x288xf32>
    %42 = arith.addf %36, %41 : vector<8x288xf32>
    %c0_38 = arith.constant 0 : index
    %c0_39 = arith.constant 0 : index
    %c37 = arith.constant 37 : index
    %43 = vector.load %arg1[%c0_38, %c0_39, %c37] : memref<1x4x326xf32, #tpu.memory_space<vmem>>, vector<1x4x288xf32>
    %44 = vector.shape_cast %43 : vector<1x4x288xf32> to vector<4x288xf32>
    %c7 = arith.constant 7 : index
    %c0_40 = arith.constant 0 : index
    %c0_41 = arith.constant 0 : index
    %45 = vector.load %arg2[%c7, %c0_40, %c0_41] : memref<9x8x4xf32, #tpu.memory_space<vmem>>, vector<1x8x4xf32>
    %46 = vector.shape_cast %45 : vector<1x8x4xf32> to vector<8x4xf32>
    %cst_42 = arith.constant dense<0.000000e+00> : vector<8x288xf32>
    %47 = tpu.matmul %46, %44, %cst_42 {dimension_numbers = #tpu.dot_dimension_numbers<[1], [0], [0], [1], [0, 0, 1, 1], [], []>} : vector<8x4xf32>, vector<4x288xf32>, vector<8x288xf32> -> vector<8x288xf32>
    %48 = arith.addf %42, %47 : vector<8x288xf32>
    %c0_43 = arith.constant 0 : index
    %c0_44 = arith.constant 0 : index
    %c38 = arith.constant 38 : index
    %49 = vector.load %arg1[%c0_43, %c0_44, %c38] : memref<1x4x326xf32, #tpu.memory_space<vmem>>, vector<1x4x288xf32>
    %50 = vector.shape_cast %49 : vector<1x4x288xf32> to vector<4x288xf32>
    %c8 = arith.constant 8 : index
    %c0_45 = arith.constant 0 : index
    %c0_46 = arith.constant 0 : index
    %51 = vector.load %arg2[%c8, %c0_45, %c0_46] : memref<9x8x4xf32, #tpu.memory_space<vmem>>, vector<1x8x4xf32>
    %52 = vector.shape_cast %51 : vector<1x8x4xf32> to vector<8x4xf32>
    %cst_47 = arith.constant dense<0.000000e+00> : vector<8x288xf32>
    %53 = tpu.matmul %52, %50, %cst_47 {dimension_numbers = #tpu.dot_dimension_numbers<[1], [0], [0], [1], [0, 0, 1, 1], [], []>} : vector<8x4xf32>, vector<4x288xf32>, vector<8x288xf32> -> vector<8x288xf32>
    %54 = arith.addf %48, %53 : vector<8x288xf32>
    %c0_48 = arith.constant 0 : index
    %c0_49 = arith.constant 0 : index
    %55 = vector.load %arg3[%c0_48, %c0_49] : memref<8x2xf32, #tpu.memory_space<vmem>>, vector<8x1xf32>
    %c0_50 = arith.constant 0 : index
    %c1_51 = arith.constant 1 : index
    %56 = vector.load %arg3[%c0_50, %c1_51] : memref<8x2xf32, #tpu.memory_space<vmem>>, vector<8x1xf32>
    %57 = vector.broadcast %55 : vector<8x1xf32> to vector<8x288xf32>
    %58 = arith.mulf %54, %57 : vector<8x288xf32>
    %59 = vector.broadcast %56 : vector<8x1xf32> to vector<8x288xf32>
    %60 = arith.addf %58, %59 : vector<8x288xf32>
    %cst_52 = arith.constant 0.000000e+00 : f32
    %61 = vector.broadcast %cst_52 : f32 to vector<8x288xf32>
    %62 = arith.subf %61, %60 : vector<8x288xf32>
    %63 = math.exp %62 : vector<8x288xf32>
    %cst_53 = arith.constant 1.000000e+00 : f32
    %64 = vector.broadcast %cst_53 : f32 to vector<8x288xf32>
    %65 = arith.addf %64, %63 : vector<8x288xf32>
    %66 = arith.divf %60, %65 : vector<8x288xf32>
    %c0_54 = arith.constant 0 : index
    %c0_55 = arith.constant 0 : index
    %c0_56 = arith.constant 0 : index
    %67 = vector.load %arg4[%c0_54, %c0_55, %c0_56] : memref<1x8x288xf32, #tpu.memory_space<vmem>>, vector<1x8x288xf32>
    %68 = vector.shape_cast %67 : vector<1x8x288xf32> to vector<8x288xf32>
    %69 = vector.shape_cast %66 : vector<8x288xf32> to vector<1x8x288xf32>
    tpu.vector_store %arg4[%c0_54, %c0_55, %c0_56], %69 {strides = array<i32>} : memref<1x8x288xf32, #tpu.memory_space<vmem>>, vector<1x8x288xf32>,
    return
  }
  func.func @transform_0(%arg0: i32) -> (i32, i32, i32) {
    %c0_i32 = arith.constant 0 : i32
    %c0_i32_0 = arith.constant 0 : i32
    %c0_i32_1 = arith.constant 0 : i32
    return %arg0, %c0_i32, %c0_i32_0 : i32, i32, i32
  }
  func.func @transform_1(%arg0: i32) -> (i32, i32, i32) {
    %c0_i32 = arith.constant 0 : i32
    %c0_i32_0 = arith.constant 0 : i32
    %c0_i32_1 = arith.constant 0 : i32
    %c0_i32_2 = arith.constant 0 : i32
    return %c0_i32, %c0_i32_0, %c0_i32_1 : i32, i32, i32
  }
  func.func @transform_2(%arg0: i32) -> (i32, i32) {
    %c0_i32 = arith.constant 0 : i32
    %c0_i32_0 = arith.constant 0 : i32
    %c0_i32_1 = arith.constant 0 : i32
    return %c0_i32, %c0_i32_0 : i32, i32
  }
  func.func @transform_3(%arg0: i32) -> (i32, i32, i32) {
    %c0_i32 = arith.constant 0 : i32
    %c0_i32_0 = arith.constant 0 : i32
    %c0_i32_1 = arith.constant 0 : i32
    return %arg0, %c0_i32, %c0_i32_0 : i32, i32, i32
  }
}

</mosaic_0001>

<llo_original>
// kernel: tile.16
$region0: #{tile.16}
  #allocation0 [shape = 's32[1]{0}', space=sflag, size = 0x4, scoped, tag = 'scoped memory for tile.16']
  %s0 = inlined_call_operand.vmem [shape: f32[18], index: 0, kind: input, shape index: {}]
  %s1 = inlined_call_operand.vmem [shape: f32[16,18], index: 1, kind: output, shape index: {}]
  // Predicated region
  $region2: #{tile.16} parent=0 // pred_check
    _
  $region3: #{tile.16} parent=0 // pred_check_branch
    %3 = sbr.rel (0) target = $region5
  $region4: #{tile.16} parent=0 // pred_region
    _
  $region5: #{tile.16} parent=0 // pred_fallthru
    _
  %v4 = vld [vmem:[%s0] ss:$0 sm:$0xff]
  %5 = vst [vmem:[%s1] sm:$0xff] %v4
  %s6 = scalar_lea.vmem %s1, 8
  %7 = vst [vmem:[%s6] sm:$0xff] %v4

// kernel: tile.17
$region0: #{tile.17}
  %s0 = inlined_call_operand.vmem [shape: f32[16,18], index: 0, kind: input, shape index: {}]
  %s1 = inlined_call_operand.vmem [shape: f32[1,288], index: 1, kind: output, shape index: {}]
  $region1: #{tile.17} parent=0
    #allocation0 [shape = 'u8[12288]{0}', space=vmem, size = 0x3000, scoped, tag = 'scoped mem for output reshape']
    %v2 = vld [vmem:[%s0] sm:$0x1]
    %vm3 = vcmask 146432
    %4 = vst.msk [vmem:[#allocation0] sm:$0x1] %vm3, %v2
    %s5 = scalar_lea.vmem %s0, 7
    %v6 = vld [vmem:[%s5] sm:$0x1]
    %s7 = scalar_lea.vmem %s0, 7
    %v8 = vld [vmem:[%s7] sm:$0x1]
    %vm9 = vcmask 15360
    %v10 = vsel %vm9, %v8, %v6
    %11 = vrot.lane.b32.xlu0 %v10, 126
    %v12 = vpop.permute.xlu0 %11
    %vm13 = vcmask 130048
    %s14 = scalar_lea.vmem [#allocation0], 8
    %15 = vst.msk [vmem:[%s14] sm:$0x1] %vm13, %v12
    %vm16 = vcmask 1048560
    %17 = vst.msk [vmem:[#allocation0] sm:$0x1] %vm16, %v12
    %s18 = scalar_lea.vmem %s0, 14
    %v19 = vld [vmem:[%s18] sm:$0x1]
    %s20 = scalar_lea.vmem %s0, 14
    %v21 = vld [vmem:[%s20] sm:$0x1]
    %vm22 = vcmask 31744
    %v23 = vsel %vm22, %v21, %v19
    %24 = vrot.lane.b32.xlu0 %v23, 124
    %v25 = vpop.permute.xlu0 %24
    %vm26 = vcmask 113664
    %s27 = scalar_lea.vmem [#allocation0], 16
    %28 = vst.msk [vmem:[%s27] sm:$0x1] %vm26, %v25
    %vm29 = vcmask 1048544
    %s30 = scalar_lea.vmem [#allocation0], 8
    %31 = vst.msk [vmem:[%s30] sm:$0x1] %vm29, %v25
    %s32 = scalar_lea.vmem %s0, 6
    %v33 = vld [vmem:[%s32] sm:$0x1]
    %34 = vrot.lane.b32.xlu0 %v33, 108
    %v35 = vpop.permute.xlu0 %34
    %vm36 = vcmask 1032032
    %37 = vst.msk [vmem:[#allocation0] sm:$0x1] %vm36, %v35
    %s38 = scalar_lea.vmem %s0, 13
    %v39 = vld [vmem:[%s38] sm:$0x1]
    %40 = vrot.lane.b32.xlu0 %v39, 106
    %v41 = vpop.permute.xlu0 %40
    %vm42 = vcmask 1015632
    %s43 = scalar_lea.vmem [#allocation0], 8
    %44 = vst.msk [vmem:[%s43] sm:$0x1] %vm42, %v41
    %s45 = scalar_lea.vmem %s0, 5
    %v46 = vld [vmem:[%s45] sm:$0x1]
    %47 = vrot.lane.b32.xlu0 %v46, 90
    %v48 = vpop.permute.xlu0 %47
    %vm49 = vcmask 884432
    %50 = vst.msk [vmem:[#allocation0] sm:$0x1] %vm49, %v48
    %s51 = scalar_lea.vmem %s0, 12
    %v52 = vld [vmem:[%s51] sm:$0x1]
    %53 = vrot.lane.b32.xlu0 %v52, 88
    %v54 = vpop.permute.xlu0 %53
    %vm55 = vcmask 868032
    %s56 = scalar_lea.vmem [#allocation0], 8
    %57 = vst.msk [vmem:[%s56] sm:$0x1] %vm55, %v54
    %s58 = scalar_lea.vmem %s0, 4
    %v59 = vld [vmem:[%s58] sm:$0x1]
    %60 = vrot.lane.b32.xlu0 %v59, 72
    %v61 = vpop.permute.xlu0 %60
    %vm62 = vcmask 736832
    %63 = vst.msk [vmem:[#allocation0] sm:$0x1] %vm62, %v61
    %s64 = scalar_lea.vmem %s0, 11
    %v65 = vld [vmem:[%s64] sm:$0x1]
    %66 = vrot.lane.b32.xlu0 %v65, 70
    %v67 = vpop.permute.xlu0 %66
    %vm68 = vcmask 720432
    %s69 = scalar_lea.vmem [#allocation0], 8
    %70 = vst.msk [vmem:[%s69] sm:$0x1] %vm68, %v67
    %s71 = scalar_lea.vmem %s0, 3
    %v72 = vld [vmem:[%s71] sm:$0x1]
    %73 = vrot.lane.b32.xlu0 %v72, 54
    %v74 = vpop.permute.xlu0 %73
    %vm75 = vcmask 589232
    %76 = vst.msk [vmem:[#allocation0] sm:$0x1] %vm75, %v74
    %s77 = scalar_lea.vmem %s0, 10
    %v78 = vld [vmem:[%s77] sm:$0x1]
    %79 = vrot.lane.b32.xlu0 %v78, 52
    %v80 = vpop.permute.xlu0 %79
    %vm81 = vcmask 572832
    %s82 = scalar_lea.vmem [#allocation0], 8
    %83 = vst.msk [vmem:[%s82] sm:$0x1] %vm81, %v80
    %s84 = scalar_lea.vmem %s0, 2
    %v85 = vld [vmem:[%s84] sm:$0x1]
    %86 = vrot.lane.b32.xlu0 %v85, 36
    %v87 = vpop.permute.xlu0 %86
    %vm88 = vcmask 441632
    %89 = vst.msk [vmem:[#allocation0] sm:$0x1] %vm88, %v87
    %s90 = scalar_lea.vmem %s0, 9
    %v91 = vld [vmem:[%s90] sm:$0x1]
    %92 = vrot.lane.b32.xlu0 %v91, 34
    %v93 = vpop.permute.xlu0 %92
    %vm94 = vcmask 425232
    %s95 = scalar_lea.vmem [#allocation0], 8
    %96 = vst.msk [vmem:[%s95] sm:$0x1] %vm94, %v93
    %s97 = scalar_lea.vmem %s0, 1
    %v98 = vld [vmem:[%s97] sm:$0x1]
    %99 = vrot.lane.b32.xlu0 %v98, 18
    %v100 = vpop.permute.xlu0 %99
    %vm101 = vcmask 294032
    %102 = vst.msk [vmem:[#allocation0] sm:$0x1] %vm101, %v100
    %s103 = scalar_lea.vmem %s0, 8
    %v104 = vld [vmem:[%s103] sm:$0x1]
    %105 = vrot.lane.b32.xlu0 %v104, 16
    %v106 = vpop.permute.xlu0 %105
    %vm107 = vcmask 277632
    %s108 = scalar_lea.vmem [#allocation0], 8
    %109 = vst.msk [vmem:[%s108] sm:$0x1] %vm107, %v106
    %s110 = scalar_lea.vmem %s0, 15
    %v111 = vld [vmem:[%s110] sm:$0x1]
    %112 = vrot.lane.b32.xlu0 %v111, 14
    %v113 = vpop.permute.xlu0 %112
    %vm114 = vcmask 261232
    %s115 = scalar_lea.vmem [#allocation0], 16
    %116 = vst.msk [vmem:[%s115] sm:$0x1] %vm114, %v113
    %s118 = ssub.s32 2, 1
    %v119 = vld [vmem:[#allocation0] sm:%s118]
    %s121 = ssub.s32 2, 1
    %122 = vst [vmem:[%s1] sm:%s121] %v119
    %s123 = scalar_lea.vmem [#allocation0], 8
    %v124 = vld [vmem:[%s123] sm:%s118]
    %s126 = ssub.s32 2, 1
    %s127 = scalar_lea.vmem %s1, 1
    %128 = vst [vmem:[%s127] sm:%s126] %v124
    %s129 = scalar_lea.vmem [#allocation0], 16
    %v130 = vld [vmem:[%s129] sm:%s118]
    %s132 = ssub.s32 2, 1
    %s133 = scalar_lea.vmem %s1, 2
    %134 = vst [vmem:[%s133] sm:%s132] %v130

// kernel: fdconv_forward.2
$region0: #{fdconv_forward.2}
  #allocation0 [shape = 'u32[]', space=smem, size = 0x4, offset = 0x4, fixed_abs, tag = 'smem constant byte address 0x4 - core index']
  #allocation1 [shape = 'u32[72,128]{1,0:T(1,128)}', space=vmem, size = 0x9000, scoped, tag = 'internal scratch']
  %s0 = inlined_call_operand.vmem [shape: f32[2,4,326], index: 0, kind: input, shape index: {}]
  %s1 = inlined_call_operand.vmem [shape: f32[9,8,4], index: 1, kind: input, shape index: {}]
  %s2 = inlined_call_operand.vmem [shape: f32[1,288], index: 2, kind: input, shape index: {}]
  %s3 = inlined_call_operand.vmem [shape: f32[2,8,2], index: 3, kind: output, shape index: {}]
  %s4 = sld [smem:[#allocation0]]
  $region45: #{fdconv_forward.2} parent=0
    _
  %s6 = ssub.s32 1, %s4
  %s7 = scalar_select 0, %s6, %s4
  loop: start=0, step=1, limit=4
  $region2: #{fdconv_forward.2} parent=0 // loop_pre_header
    _
  $region3: #{fdconv_forward.2} parent=0 // loop_header
    %s9 = sphi 0, %s13
    %p10 = scmp.ge.s32.totalorder %s9, 4
    %s19 = sphi 0, %s21
    %s22 = sphi 0, %s19
    %s23 = sphi 0, %s22
    %s39 = sphi 0, %s23
    %s43 = sphi 0, %s43
    %s45 = sphi 0, %s43
    %s46 = sphi 0, %s45
    %s60 = sphi 0, %s46
    %s64 = sphi 0, %s64
    %s66 = sphi 0, %s64
    %s67 = sphi 0, %s66
    %s81 = sphi 0, %s67
    %s87 = sphi 0, %s89
    %s90 = sphi 0, %s87
    %s91 = sphi 0, %s90
    %s107 = sphi 0, %s91
  $region4: #{fdconv_forward.2} parent=0 // loop_header_branch
    %12 = sbr.rel (%p10) target = $region8
  $region5: #{fdconv_forward.2} parent=0 // loop_body
    %s14 = ssub.s32 %s9, 1
    %s15 = ssub.s32 %s9, 2
    %s16 = sadd.s32 %s9, 1
    %s17 = ssub.s32 %s9, %s16
    %p18 = scmp.eq.s32.totalorder %s17, 0
    %s20 = sadd.s32 %s19, 1
    %s21 = scalar_select %p18, %s19, %s20
    %p24 = pneg %p18
    %p25 = scmp.eq.s32.totalorder %s9, 1
    %p26 = por %p24, %p25
    %p27 = scmp.ne.s32.totalorder %s19, %s22
    %p28 = scmp.eq.s32.totalorder %s9, 0
    %p29 = por %p27, %p28
    %p30 = scmp.ne.s32.totalorder %s19, %s22
    %p31 = scmp.eq.s32.totalorder %s14, 1
    %p32 = por %p30, %p31
    %p33 = scmp.ne.s32.totalorder %s22, %s23
    %p34 = scmp.eq.s32.totalorder %s14, 0
    %p35 = por %p33, %p34
    %p36 = scmp.ne.s32.totalorder %s22, %s23
    %p37 = scmp.eq.s32.totalorder %s15, 1
    %p38 = por %p36, %p37
    %p40 = scmp.ne.s32.totalorder %s23, %s39
    %p41 = scmp.eq.s32.totalorder %s15, 0
    %p42 = por %p40, %p41
    %s44 = sadd.s32 %s43, 1
    %p47 = scmp.eq.s32.totalorder %s9, 1
    %p48 = scmp.ne.s32.totalorder %s43, %s45
    %p49 = scmp.eq.s32.totalorder %s9, 0
    %p50 = por %p48, %p49
    %p51 = scmp.ne.s32.totalorder %s43, %s45
    %p52 = scmp.eq.s32.totalorder %s14, 1
    %p53 = por %p51, %p52
    %p54 = scmp.ne.s32.totalorder %s45, %s46
    %p55 = scmp.eq.s32.totalorder %s14, 0
    %p56 = por %p54, %p55
    %p57 = scmp.ne.s32.totalorder %s45, %s46
    %p58 = scmp.eq.s32.totalorder %s15, 1
    %p59 = por %p57, %p58
    %p61 = scmp.ne.s32.totalorder %s46, %s60
    %p62 = scmp.eq.s32.totalorder %s15, 0
    %p63 = por %p61, %p62
    %s65 = sadd.s32 %s64, 1
    %p68 = scmp.eq.s32.totalorder %s9, 1
    %p69 = scmp.ne.s32.totalorder %s64, %s66
    %p70 = scmp.eq.s32.totalorder %s9, 0
    %p71 = por %p69, %p70
    %p72 = scmp.ne.s32.totalorder %s64, %s66
    %p73 = scmp.eq.s32.totalorder %s14, 1
    %p74 = por %p72, %p73
    %p75 = scmp.ne.s32.totalorder %s66, %s67
    %p76 = scmp.eq.s32.totalorder %s14, 0
    %p77 = por %p75, %p76
    %p78 = scmp.ne.s32.totalorder %s66, %s67
    %p79 = scmp.eq.s32.totalorder %s15, 1
    %p80 = por %p78, %p79
    %p82 = scmp.ne.s32.totalorder %s67, %s81
    %p83 = scmp.eq.s32.totalorder %s15, 0
    %p84 = por %p82, %p83
    %s85 = ssub.s32 %s9, %s16
    %p86 = scmp.eq.s32.totalorder %s85, 0
    %s88 = sadd.s32 %s87, 1
    %s89 = scalar_select %p86, %s87, %s88
    %p92 = pneg %p86
    %p93 = scmp.eq.s32.totalorder %s9, 1
    %p94 = por %p92, %p93
    %p95 = scmp.ne.s32.totalorder %s87, %s90
    %p96 = scmp.eq.s32.totalorder %s9, 0
    %p97 = por %p95, %p96
    %p98 = scmp.ne.s32.totalorder %s87, %s90
    %p99 = scmp.eq.s32.totalorder %s14, 1
    %p100 = por %p98, %p99
    %p101 = scmp.ne.s32.totalorder %s90, %s91
    %p102 = scmp.eq.s32.totalorder %s14, 0
    %p103 = por %p101, %p102
    %p104 = scmp.ne.s32.totalorder %s90, %s91
    %p105 = scmp.eq.s32.totalorder %s15, 1
    %p106 = por %p104, %p105
    %p108 = scmp.ne.s32.totalorder %s91, %s107
    %p109 = scmp.eq.s32.totalorder %s15, 0
    %p110 = por %p108, %p109
    %p111 = scmp.le.s32.totalorder 1, %s9
    %p112 = scmp.lt.s32.totalorder %s9, 3
    %p113 = pnand %p111, %p112
    %p114 = pneg %p113
    // Predicated region
    $region9: #{fdconv_forward.2} parent=5 // pred_check
      _
    $region10: #{fdconv_forward.2} parent=5 // pred_check_branch
      %116 = sbr.rel (%p113) target = $region12
    $region11: #{fdconv_forward.2} parent=5 // pred_region
      %s117 = ssub.s32 %s9, 1
      // Predicated region
      $region13: #{fdconv_forward.2} parent=11 // pred_check
        %p118 = pneg %p56
      $region14: #{fdconv_forward.2} parent=11 // pred_check_branch
        %120 = sbr.rel (%p118) target = $region16
      $region15: #{fdconv_forward.2} parent=11 // pred_region
        _
      $region16: #{fdconv_forward.2} parent=11 // pred_fallthru
        _
      // Predicated region
      $region17: #{fdconv_forward.2} parent=11 // pred_check
        %p121 = pneg %p77
      $region18: #{fdconv_forward.2} parent=11 // pred_check_branch
        %123 = sbr.rel (%p121) target = $region20
      $region19: #{fdconv_forward.2} parent=11 // pred_region
        _
      $region20: #{fdconv_forward.2} parent=11 // pred_fallthru
        _
    $region12: #{fdconv_forward.2} parent=5 // pred_fallthru
      _
    %p124 = scmp.lt.s32.totalorder %s9, 2
    // Predicated region
    $region21: #{fdconv_forward.2} parent=5 // pred_check
      %p125 = pneg %p124
    $region22: #{fdconv_forward.2} parent=5 // pred_check_branch
      %127 = sbr.rel (%p125) target = $region24
    $region23: #{fdconv_forward.2} parent=5 // pred_region
      // Predicated region
      $region25: #{fdconv_forward.2} parent=23 // pred_check
        %p128 = pneg %p29
      $region26: #{fdconv_forward.2} parent=23 // pred_check_branch
        %130 = sbr.rel (%p128) target = $region28
      $region27: #{fdconv_forward.2} parent=23 // pred_region
        %p131 = scmp.lt.s32.totalorder %s9, 1
        %s132 = scalar_select %p131, %s9, 1
        %s133 = smul.addr %s132, 3
        %s134 = smul.addr %s133, 4
        %s135 = scalar_lea.vmem %s0, %s134
      $region28: #{fdconv_forward.2} parent=23 // pred_fallthru
        _
    $region24: #{fdconv_forward.2} parent=5 // pred_fallthru
      _
    %p136 = scmp.le.s32.totalorder 1, %s9
    %p137 = scmp.lt.s32.totalorder %s9, 3
    %p138 = pnand %p136, %p137
    %p139 = pneg %p138
    // Predicated region
    $region29: #{fdconv_forward.2} parent=5 // pred_check
      _
    $region30: #{fdconv_forward.2} parent=5 // pred_check_branch
      %141 = sbr.rel (%p138) target = $region32
    $region31: #{fdconv_forward.2} parent=5 // pred_region
      %s142 = ssub.s32 %s9, 1
      %p143 = scmp.lt.s32.totalorder %s14, 1
      %s144 = scalar_select %p143, %s14, 1
      %s145 = smul.addr %s144, 3
      %s146 = smul.addr %s145, 4
      %s147 = scalar_lea.vmem %s0, %s146
      %p148 = pneg %p35
      %p149 = pneg %p32
      %p150 = pneg %p56
      %p151 = pneg %p53
      %p152 = pneg %p77
      %p153 = pneg %p74
      %p154 = pneg %p103
      %p155 = pneg %p100
      %p156 = scmp.lt.s32.totalorder %s14, 1
      %s157 = scalar_select %p156, %s14, 1
      %s158 = smul.addr %s157, 8
      %s159 = scalar_lea.vmem %s3, %s158
      %p160 = scmp.lt.s32.totalorder %s14, 1
      %s161 = scalar_select %p160, %s14, 1
      %s162 = smul.addr %s161, 3
      %s163 = smul.addr %s162, 4
      %s164 = scalar_lea.vmem %s0, %s163
      %p165 = scmp.lt.s32.totalorder %s14, 1
      %s166 = scalar_select %p165, %s14, 1
      %s167 = smul.addr %s166, 8
      %s168 = scalar_lea.vmem %s3, %s167
      %v169 = vld [vmem:[%s164] sm:$0xff]
      %v170 = vld [vmem:[%s164 + $0x8] sm:$0xf]
      %v171 = vld [vmem:[%s1] sm:$0xff]
      %s172 = scalar_lea.vmem %s1, 8
      %v173 = vld [vmem:[%s172] sm:$0xff]
      %176 = vst [vmem:[#allocation1] ss:$2 sm:$0xff] %v169
      %s177 = scalar_lea.vmem [#allocation1], 16
      %178 = vst [vmem:[%s177] ss:$2 sm:$0xff] %v170
      %v179 = vld.sshfl [vmem:[#allocation1] sm:$0xff pattern:$0x75316420]
      %v180 = vld.sshfl [vmem:[#allocation1 + $0x8] sm:$0xff pattern:$0x75316420]
      %v181 = vld.sshfl [vmem:[#allocation1 + $0x10] sm:$0xff pattern:$0x75316420]
      %182 = vrot.lane.b32.xlu0 %v179, 127
      %v183 = vpop.permute.xlu0 %182
      %184 = vrot.lane.b32.xlu0 %v180, 127
      %v185 = vpop.permute.xlu0 %184
      %186 = vrot.lane.b32.xlu0 %v181, 127
      %v187 = vpop.permute.xlu0 %186
      %vm188 = vcmask 1039360
      %v189 = vsel %vm188, %v183, %v185
      %v190 = vsel %vm188, %v185, %v187
      %vm191 = vcmask 31744
      %v193 = vsel %vm191, %v173, 0
      %vm195 = vcmask 1043456
      %v196 = vsel %vm195, %v189, 0
      %v198 = vsel %vm195, %v190, 0
      %v200 = vsel %vm195, %v187, 0
      %202 = vmatpush.msra.mxu0 0.0
      %203 = vmatpush.msra.mxu0 0.0
      %204 = vmatpush.msra.mxu0 0.0
      %205 = vmatpush.msra.mxu0 0.0
      %206 = vmatpush.msra.mxu0 0.0
      %207 = vmatpush.msra.mxu0 0.0
      %208 = vmatpush.msra.mxu0 0.0
      %209 = vmatpush.msra.mxu0 0.0
      %210 = vmatpush.msra.mxu0 0.0
      %211 = vmatpush.msra.mxu0 0.0
      %212 = vmatpush.msra.mxu0 0.0
      %213 = vmatpush.msra.mxu0 0.0
      %214 = vmatpush.msra.mxu0 0.0
      %215 = vmatpush.msra.mxu0 0.0
      %216 = vmatpush.msra.mxu0 0.0
      %217 = vmatpush.msra.mxu0 %v196
      %218 = vmatmul.f32.gmra.mxu0 %v193
      %v219 = vpop.f32.mrf.mxu0
      %v220 = vadd.f32 0.0, %v219
      %221 = vdwg.mxu0
      %222 = vmatpush.msra.mxu0 0.0
      %223 = vmatpush.msra.mxu0 0.0
      %224 = vmatpush.msra.mxu0 0.0
      %225 = vmatpush.msra.mxu0 0.0
      %226 = vmatpush.msra.mxu0 0.0
      %227 = vmatpush.msra.mxu0 0.0
      %228 = vmatpush.msra.mxu0 0.0
      %229 = vmatpush.msra.mxu0 0.0
      %230 = vmatpush.msra.mxu0 0.0
      %231 = vmatpush.msra.mxu0 0.0
      %232 = vmatpush.msra.mxu0 0.0
      %233 = vmatpush.msra.mxu0 0.0
      %234 = vmatpush.msra.mxu0 0.0
      %235 = vmatpush.msra.mxu0 0.0
      %236 = vmatpush.msra.mxu0 0.0
      %237 = vmatpush.msra.mxu0 %v198
      %238 = vmatmul.f32.gmra.mxu0 %v193
      %v239 = vpop.f32.mrf.mxu0
      %v240 = vadd.f32 0.0, %v239
      %241 = vdwg.mxu0
      %242 = vmatpush.msra.mxu0 0.0
      %243 = vmatpush.msra.mxu0 0.0
      %244 = vmatpush.msra.mxu0 0.0
      %245 = vmatpush.msra.mxu0 0.0
      %246 = vmatpush.msra.mxu0 0.0
      %247 = vmatpush.msra.mxu0 0.0
      %248 = vmatpush.msra.mxu0 0.0
      %249 = vmatpush.msra.mxu0 0.0
      %250 = vmatpush.msra.mxu0 0.0
      %251 = vmatpush.msra.mxu0 0.0
      %252 = vmatpush.msra.mxu0 0.0
      %253 = vmatpush.msra.mxu0 0.0
      %254 = vmatpush.msra.mxu0 0.0
      %255 = vmatpush.msra.mxu0 0.0
      %256 = vmatpush.msra.mxu0 0.0
      %257 = vmatpush.msra.mxu0 %v200
      %258 = vmatmul.f32.gmra.mxu0 %v193
      %v259 = vpop.f32.mrf.mxu0
      %v260 = vadd.f32 0.0, %v259
      %261 = vdwg.mxu0
      %262 = vst [vmem:[#allocation1] ss:$2 sm:$0xff] %v169
      %s263 = scalar_lea.vmem [#allocation1], 16
      %264 = vst [vmem:[%s263] ss:$2 sm:$0xff] %v170
      %v265 = vld.sshfl [vmem:[#allocation1] sm:$0xff pattern:$0x75316420]
      %v266 = vld.sshfl [vmem:[#allocation1 + $0x8] sm:$0xff pattern:$0x75316420]
      %v267 = vld.sshfl [vmem:[#allocation1 + $0x10] sm:$0xff pattern:$0x75316420]
      %v269 = vsel %vm191, %v171, 0
      %v271 = vsel %vm195, %v265, 0
      %v273 = vsel %vm195, %v266, 0
      %v275 = vsel %vm195, %v267, 0
      %277 = vmatpush.msra.mxu0 0.0
      %278 = vmatpush.msra.mxu0 0.0
      %279 = vmatpush.msra.mxu0 0.0
      %280 = vmatpush.msra.mxu0 0.0
      %281 = vmatpush.msra.mxu0 0.0
      %282 = vmatpush.msra.mxu0 0.0
      %283 = vmatpush.msra.mxu0 0.0
      %284 = vmatpush.msra.mxu0 0.0
      %285 = vmatpush.msra.mxu0 0.0
      %286 = vmatpush.msra.mxu0 0.0
      %287 = vmatpush.msra.mxu0 0.0
      %288 = vmatpush.msra.mxu0 0.0
      %289 = vmatpush.msra.mxu0 0.0
      %290 = vmatpush.msra.mxu0 0.0
      %291 = vmatpush.msra.mxu0 0.0
      %292 = vmatpush.msra.mxu0 %v271
      %293 = vmatmul.f32.gmra.mxu0 %v269
      %v294 = vpop.f32.mrf.mxu0
      %v295 = vadd.f32 %v220, %v294
      %296 = vdwg.mxu0
      %297 = vmatpush.msra.mxu0 0.0
      %298 = vmatpush.msra.mxu0 0.0
      %299 = vmatpush.msra.mxu0 0.0
      %300 = vmatpush.msra.mxu0 0.0
      %301 = vmatpush.msra.mxu0 0.0
      %302 = vmatpush.msra.mxu0 0.0
      %303 = vmatpush.msra.mxu0 0.0
      %304 = vmatpush.msra.mxu0 0.0
      %305 = vmatpush.msra.mxu0 0.0
      %306 = vmatpush.msra.mxu0 0.0
      %307 = vmatpush.msra.mxu0 0.0
      %308 = vmatpush.msra.mxu0 0.0
      %309 = vmatpush.msra.mxu0 0.0
      %310 = vmatpush.msra.mxu0 0.0
      %311 = vmatpush.msra.mxu0 0.0
      %312 = vmatpush.msra.mxu0 %v273
      %313 = vmatmul.f32.gmra.mxu0 %v269
      %v314 = vpop.f32.mrf.mxu0
      %v315 = vadd.f32 %v240, %v314
      %316 = vdwg.mxu0
      %317 = vmatpush.msra.mxu0 0.0
      %318 = vmatpush.msra.mxu0 0.0
      %319 = vmatpush.msra.mxu0 0.0
      %320 = vmatpush.msra.mxu0 0.0
      %321 = vmatpush.msra.mxu0 0.0
      %322 = vmatpush.msra.mxu0 0.0
      %323 = vmatpush.msra.mxu0 0.0
      %324 = vmatpush.msra.mxu0 0.0
      %325 = vmatpush.msra.mxu0 0.0
      %326 = vmatpush.msra.mxu0 0.0
      %327 = vmatpush.msra.mxu0 0.0
      %328 = vmatpush.msra.mxu0 0.0
      %329 = vmatpush.msra.mxu0 0.0
      %330 = vmatpush.msra.mxu0 0.0
      %331 = vmatpush.msra.mxu0 0.0
      %332 = vmatpush.msra.mxu0 %v275
      %333 = vmatmul.f32.gmra.mxu0 %v269
      %v334 = vpop.f32.mrf.mxu0
      %v335 = vadd.f32 %v260, %v334
      %336 = vdwg.mxu0
      %v337 = vld [vmem:[%s164] sm:$0xff]
      %v338 = vld [vmem:[%s164 + $0x8] sm:$0xf]
      %s339 = scalar_lea.vmem %s1, 16
      %v340 = vld [vmem:[%s339] sm:$0xff]
      %343 = vst [vmem:[#allocation1] ss:$2 sm:$0xff] %v337
      %s344 = scalar_lea.vmem [#allocation1], 16
      %345 = vst [vmem:[%s344] ss:$2 sm:$0xff] %v338
      %v346 = vld.sshfl [vmem:[#allocation1] sm:$0xff pattern:$0x75316420]
      %v347 = vld.sshfl [vmem:[#allocation1 + $0x8] sm:$0xff pattern:$0x75316420]
      %v348 = vld.sshfl [vmem:[#allocation1 + $0x10] sm:$0xff pattern:$0x75316420]
      %349 = vrot.lane.b32.xlu0 %v346, 126
      %v350 = vpop.permute.xlu0 %349
      %351 = vrot.lane.b32.xlu0 %v347, 126
      %v352 = vpop.permute.xlu0 %351
      %353 = vrot.lane.b32.xlu0 %v348, 126
      %v354 = vpop.permute.xlu0 %353
      %vm355 = vcmask 1031168
      %v356 = vsel %vm355, %v350, %v352
      %v357 = vsel %vm355, %v352, %v354
      %v359 = vsel %vm191, %v340, 0
      %v361 = vsel %vm195, %v356, 0
      %v363 = vsel %vm195, %v357, 0
      %v365 = vsel %vm195, %v354, 0
      %367 = vmatpush.msra.mxu0 0.0
      %368 = vmatpush.msra.mxu0 0.0
      %369 = vmatpush.msra.mxu0 0.0
      %370 = vmatpush.msra.mxu0 0.0
      %371 = vmatpush.msra.mxu0 0.0
      %372 = vmatpush.msra.mxu0 0.0
      %373 = vmatpush.msra.mxu0 0.0
      %374 = vmatpush.msra.mxu0 0.0
      %375 = vmatpush.msra.mxu0 0.0
      %376 = vmatpush.msra.mxu0 0.0
      %377 = vmatpush.msra.mxu0 0.0
      %378 = vmatpush.msra.mxu0 0.0
      %379 = vmatpush.msra.mxu0 0.0
      %380 = vmatpush.msra.mxu0 0.0
      %381 = vmatpush.msra.mxu0 0.0
      %382 = vmatpush.msra.mxu0 %v361
      %383 = vmatmul.f32.gmra.mxu0 %v359
      %v384 = vpop.f32.mrf.mxu0
      %v385 = vadd.f32 0.0, %v384
      %386 = vdwg.mxu0
      %387 = vmatpush.msra.mxu0 0.0
      %388 = vmatpush.msra.mxu0 0.0
      %389 = vmatpush.msra.mxu0 0.0
      %390 = vmatpush.msra.mxu0 0.0
      %391 = vmatpush.msra.mxu0 0.0
      %392 = vmatpush.msra.mxu0 0.0
      %393 = vmatpush.msra.mxu0 0.0
      %394 = vmatpush.msra.mxu0 0.0
      %395 = vmatpush.msra.mxu0 0.0
      %396 = vmatpush.msra.mxu0 0.0
      %397 = vmatpush.msra.mxu0 0.0
      %398 = vmatpush.msra.mxu0 0.0
      %399 = vmatpush.msra.mxu0 0.0
      %400 = vmatpush.msra.mxu0 0.0
      %401 = vmatpush.msra.mxu0 0.0
      %402 = vmatpush.msra.mxu0 %v363
      %403 = vmatmul.f32.gmra.mxu0 %v359
      %v404 = vpop.f32.mrf.mxu0
      %v405 = vadd.f32 0.0, %v404
      %406 = vdwg.mxu0
      %407 = vmatpush.msra.mxu0 0.0
      %408 = vmatpush.msra.mxu0 0.0
      %409 = vmatpush.msra.mxu0 0.0
      %410 = vmatpush.msra.mxu0 0.0
      %411 = vmatpush.msra.mxu0 0.0
      %412 = vmatpush.msra.mxu0 0.0
      %413 = vmatpush.msra.mxu0 0.0
      %414 = vmatpush.msra.mxu0 0.0
      %415 = vmatpush.msra.mxu0 0.0
      %416 = vmatpush.msra.mxu0 0.0
      %417 = vmatpush.msra.mxu0 0.0
      %418 = vmatpush.msra.mxu0 0.0
      %419 = vmatpush.msra.mxu0 0.0
      %420 = vmatpush.msra.mxu0 0.0
      %421 = vmatpush.msra.mxu0 0.0
      %422 = vmatpush.msra.mxu0 %v365
      %423 = vmatmul.f32.gmra.mxu0 %v359
      %v424 = vpop.f32.mrf.mxu0
      %v425 = vadd.f32 0.0, %v424
      %426 = vdwg.mxu0
      %v427 = vadd.f32 %v295, %v385
      %v428 = vadd.f32 %v315, %v405
      %v429 = vadd.f32 %v335, %v425
      %v430 = vld [vmem:[%s164] sm:$0xff]
      %v431 = vld [vmem:[%s164 + $0x8] sm:$0xf]
      %s432 = scalar_lea.vmem %s1, 24
      %v433 = vld [vmem:[%s432] sm:$0xff]
      %436 = vst [vmem:[#allocation1] ss:$2 sm:$0xff] %v430
      %s437 = scalar_lea.vmem [#allocation1], 16
      %438 = vst [vmem:[%s437] ss:$2 sm:$0xff] %v431
      %v439 = vld.sshfl [vmem:[#allocation1] sm:$0xff pattern:$0x75316420]
      %v440 = vld.sshfl [vmem:[#allocation1 + $0x8] sm:$0xff pattern:$0x75316420]
      %v441 = vld.sshfl [vmem:[#allocation1 + $0x10] sm:$0xff pattern:$0x75316420]
      %442 = vrot.lane.b32.xlu0 %v439, 110
      %v443 = vpop.permute.xlu0 %442
      %444 = vrot.lane.b32.xlu0 %v440, 110
      %v445 = vpop.permute.xlu0 %444
      %446 = vrot.lane.b32.xlu0 %v441, 110
      %v447 = vpop.permute.xlu0 %446
      %vm448 = vcmask 900096
      %v449 = vsel %vm448, %v443, %v445
      %v450 = vsel %vm448, %v445, %v447
      %v452 = vsel %vm191, %v433, 0
      %v454 = vsel %vm195, %v449, 0
      %v456 = vsel %vm195, %v450, 0
      %v458 = vsel %vm195, %v447, 0
      %460 = vmatpush.msra.mxu0 0.0
      %461 = vmatpush.msra.mxu0 0.0
      %462 = vmatpush.msra.mxu0 0.0
      %463 = vmatpush.msra.mxu0 0.0
      %464 = vmatpush.msra.mxu0 0.0
      %465 = vmatpush.msra.mxu0 0.0
      %466 = vmatpush.msra.mxu0 0.0
      %467 = vmatpush.msra.mxu0 0.0
      %468 = vmatpush.msra.mxu0 0.0
      %469 = vmatpush.msra.mxu0 0.0
      %470 = vmatpush.msra.mxu0 0.0
      %471 = vmatpush.msra.mxu0 0.0
      %472 = vmatpush.msra.mxu0 0.0
      %473 = vmatpush.msra.mxu0 0.0
      %474 = vmatpush.msra.mxu0 0.0
      %475 = vmatpush.msra.mxu0 %v454
      %476 = vmatmul.f32.gmra.mxu0 %v452
      %v477 = vpop.f32.mrf.mxu0
      %v478 = vadd.f32 0.0, %v477
      %479 = vdwg.mxu0
      %480 = vmatpush.msra.mxu0 0.0
      %481 = vmatpush.msra.mxu0 0.0
      %482 = vmatpush.msra.mxu0 0.0
      %483 = vmatpush.msra.mxu0 0.0
      %484 = vmatpush.msra.mxu0 0.0
      %485 = vmatpush.msra.mxu0 0.0
      %486 = vmatpush.msra.mxu0 0.0
      %487 = vmatpush.msra.mxu0 0.0
      %488 = vmatpush.msra.mxu0 0.0
      %489 = vmatpush.msra.mxu0 0.0
      %490 = vmatpush.msra.mxu0 0.0
      %491 = vmatpush.msra.mxu0 0.0
      %492 = vmatpush.msra.mxu0 0.0
      %493 = vmatpush.msra.mxu0 0.0
      %494 = vmatpush.msra.mxu0 0.0
      %495 = vmatpush.msra.mxu0 %v456
      %496 = vmatmul.f32.gmra.mxu0 %v452
      %v497 = vpop.f32.mrf.mxu0
      %v498 = vadd.f32 0.0, %v497
      %499 = vdwg.mxu0
      %500 = vmatpush.msra.mxu0 0.0
      %501 = vmatpush.msra.mxu0 0.0
      %502 = vmatpush.msra.mxu0 0.0
      %503 = vmatpush.msra.mxu0 0.0
      %504 = vmatpush.msra.mxu0 0.0
      %505 = vmatpush.msra.mxu0 0.0
      %506 = vmatpush.msra.mxu0 0.0
      %507 = vmatpush.msra.mxu0 0.0
      %508 = vmatpush.msra.mxu0 0.0
      %509 = vmatpush.msra.mxu0 0.0
      %510 = vmatpush.msra.mxu0 0.0
      %511 = vmatpush.msra.mxu0 0.0
      %512 = vmatpush.msra.mxu0 0.0
      %513 = vmatpush.msra.mxu0 0.0
      %514 = vmatpush.msra.mxu0 0.0
      %515 = vmatpush.msra.mxu0 %v458
      %516 = vmatmul.f32.gmra.mxu0 %v452
      %v517 = vpop.f32.mrf.mxu0
      %v518 = vadd.f32 0.0, %v517
      %519 = vdwg.mxu0
      %v520 = vadd.f32 %v427, %v478
      %v521 = vadd.f32 %v428, %v498
      %v522 = vadd.f32 %v429, %v518
      %v523 = vld [vmem:[%s164] sm:$0xff]
      %v524 = vld [vmem:[%s164 + $0x8] sm:$0xf]
      %s525 = scalar_lea.vmem %s1, 32
      %v526 = vld [vmem:[%s525] sm:$0xff]
      %529 = vst [vmem:[#allocation1] ss:$2 sm:$0xff] %v523
      %s530 = scalar_lea.vmem [#allocation1], 16
      %531 = vst [vmem:[%s530] ss:$2 sm:$0xff] %v524
      %v532 = vld.sshfl [vmem:[#allocation1] sm:$0xff pattern:$0x75316420]
      %v533 = vld.sshfl [vmem:[#allocation1 + $0x8] sm:$0xff pattern:$0x75316420]
      %v534 = vld.sshfl [vmem:[#allocation1 + $0x10] sm:$0xff pattern:$0x75316420]
      %535 = vrot.lane.b32.xlu0 %v532, 109
      %v536 = vpop.permute.xlu0 %535
      %537 = vrot.lane.b32.xlu0 %v533, 109
      %v538 = vpop.permute.xlu0 %537
      %539 = vrot.lane.b32.xlu0 %v534, 109
      %v540 = vpop.permute.xlu0 %539
      %vm541 = vcmask 891904
      %v542 = vsel %vm541, %v536, %v538
      %v543 = vsel %vm541, %v538, %v540
      %v545 = vsel %vm191, %v526, 0
      %v547 = vsel %vm195, %v542, 0
      %v549 = vsel %vm195, %v543, 0
      %v551 = vsel %vm195, %v540, 0
      %553 = vmatpush.msra.mxu0 0.0
      %554 = vmatpush.msra.mxu0 0.0
      %555 = vmatpush.msra.mxu0 0.0
      %556 = vmatpush.msra.mxu0 0.0
      %557 = vmatpush.msra.mxu0 0.0
      %558 = vmatpush.msra.mxu0 0.0
      %559 = vmatpush.msra.mxu0 0.0
      %560 = vmatpush.msra.mxu0 0.0
      %561 = vmatpush.msra.mxu0 0.0
      %562 = vmatpush.msra.mxu0 0.0
      %563 = vmatpush.msra.mxu0 0.0
      %564 = vmatpush.msra.mxu0 0.0
      %565 = vmatpush.msra.mxu0 0.0
      %566 = vmatpush.msra.mxu0 0.0
      %567 = vmatpush.msra.mxu0 0.0
      %568 = vmatpush.msra.mxu0 %v547
      %569 = vmatmul.f32.gmra.mxu0 %v545
      %v570 = vpop.f32.mrf.mxu0
      %v571 = vadd.f32 0.0, %v570
      %572 = vdwg.mxu0
      %573 = vmatpush.msra.mxu0 0.0
      %574 = vmatpush.msra.mxu0 0.0
      %575 = vmatpush.msra.mxu0 0.0
      %576 = vmatpush.msra.mxu0 0.0
      %577 = vmatpush.msra.mxu0 0.0
      %578 = vmatpush.msra.mxu0 0.0
      %579 = vmatpush.msra.mxu0 0.0
      %580 = vmatpush.msra.mxu0 0.0
      %581 = vmatpush.msra.mxu0 0.0
      %582 = vmatpush.msra.mxu0 0.0
      %583 = vmatpush.msra.mxu0 0.0
      %584 = vmatpush.msra.mxu0 0.0
      %585 = vmatpush.msra.mxu0 0.0
      %586 = vmatpush.msra.mxu0 0.0
      %587 = vmatpush.msra.mxu0 0.0
      %588 = vmatpush.msra.mxu0 %v549
      %589 = vmatmul.f32.gmra.mxu0 %v545
      %v590 = vpop.f32.mrf.mxu0
      %v591 = vadd.f32 0.0, %v590
      %592 = vdwg.mxu0
      %593 = vmatpush.msra.mxu0 0.0
      %594 = vmatpush.msra.mxu0 0.0
      %595 = vmatpush.msra.mxu0 0.0
      %596 = vmatpush.msra.mxu0 0.0
      %597 = vmatpush.msra.mxu0 0.0
      %598 = vmatpush.msra.mxu0 0.0
      %599 = vmatpush.msra.mxu0 0.0
      %600 = vmatpush.msra.mxu0 0.0
      %601 = vmatpush.msra.mxu0 0.0
      %602 = vmatpush.msra.mxu0 0.0
      %603 = vmatpush.msra.mxu0 0.0
      %604 = vmatpush.msra.mxu0 0.0
      %605 = vmatpush.msra.mxu0 0.0
      %606 = vmatpush.msra.mxu0 0.0
      %607 = vmatpush.msra.mxu0 0.0
      %608 = vmatpush.msra.mxu0 %v551
      %609 = vmatmul.f32.gmra.mxu0 %v545
      %v610 = vpop.f32.mrf.mxu0
      %v611 = vadd.f32 0.0, %v610
      %612 = vdwg.mxu0
      %v613 = vadd.f32 %v520, %v571
      %v614 = vadd.f32 %v521, %v591
      %v615 = vadd.f32 %v522, %v611
      %v616 = vld [vmem:[%s164] sm:$0xff]
      %v617 = vld [vmem:[%s164 + $0x8] sm:$0xf]
      %s618 = scalar_lea.vmem %s1, 40
      %v619 = vld [vmem:[%s618] sm:$0xff]
      %622 = vst [vmem:[#allocation1] ss:$2 sm:$0xff] %v616
      %s623 = scalar_lea.vmem [#allocation1], 16
      %624 = vst [vmem:[%s623] ss:$2 sm:$0xff] %v617
      %v625 = vld.sshfl [vmem:[#allocation1] sm:$0xff pattern:$0x75316420]
      %v626 = vld.sshfl [vmem:[#allocation1 + $0x8] sm:$0xff pattern:$0x75316420]
      %v627 = vld.sshfl [vmem:[#allocation1 + $0x10] sm:$0xff pattern:$0x75316420]
      %628 = vrot.lane.b32.xlu0 %v625, 108
      %v629 = vpop.permute.xlu0 %628
      %630 = vrot.lane.b32.xlu0 %v626, 108
      %v631 = vpop.permute.xlu0 %630
      %632 = vrot.lane.b32.xlu0 %v627, 108
      %v633 = vpop.permute.xlu0 %632
      %vm634 = vcmask 883712
      %v635 = vsel %vm634, %v629, %v631
      %v636 = vsel %vm634, %v631, %v633
      %v638 = vsel %vm191, %v619, 0
      %v640 = vsel %vm195, %v635, 0
      %v642 = vsel %vm195, %v636, 0
      %v644 = vsel %vm195, %v633, 0
      %646 = vmatpush.msra.mxu0 0.0
      %647 = vmatpush.msra.mxu0 0.0
      %648 = vmatpush.msra.mxu0 0.0
      %649 = vmatpush.msra.mxu0 0.0
      %650 = vmatpush.msra.mxu0 0.0
      %651 = vmatpush.msra.mxu0 0.0
      %652 = vmatpush.msra.mxu0 0.0
      %653 = vmatpush.msra.mxu0 0.0
      %654 = vmatpush.msra.mxu0 0.0
      %655 = vmatpush.msra.mxu0 0.0
      %656 = vmatpush.msra.mxu0 0.0
      %657 = vmatpush.msra.mxu0 0.0
      %658 = vmatpush.msra.mxu0 0.0
      %659 = vmatpush.msra.mxu0 0.0
      %660 = vmatpush.msra.mxu0 0.0
      %661 = vmatpush.msra.mxu0 %v640
      %662 = vmatmul.f32.gmra.mxu0 %v638
      %v663 = vpop.f32.mrf.mxu0
      %v664 = vadd.f32 0.0, %v663
      %665 = vdwg.mxu0
      %666 = vmatpush.msra.mxu0 0.0
      %667 = vmatpush.msra.mxu0 0.0
      %668 = vmatpush.msra.mxu0 0.0
      %669 = vmatpush.msra.mxu0 0.0
      %670 = vmatpush.msra.mxu0 0.0
      %671 = vmatpush.msra.mxu0 0.0
      %672 = vmatpush.msra.mxu0 0.0
      %673 = vmatpush.msra.mxu0 0.0
      %674 = vmatpush.msra.mxu0 0.0
      %675 = vmatpush.msra.mxu0 0.0
      %676 = vmatpush.msra.mxu0 0.0
      %677 = vmatpush.msra.mxu0 0.0
      %678 = vmatpush.msra.mxu0 0.0
      %679 = vmatpush.msra.mxu0 0.0
      %680 = vmatpush.msra.mxu0 0.0
      %681 = vmatpush.msra.mxu0 %v642
      %682 = vmatmul.f32.gmra.mxu0 %v638
      %v683 = vpop.f32.mrf.mxu0
      %v684 = vadd.f32 0.0, %v683
      %685 = vdwg.mxu0
      %686 = vmatpush.msra.mxu0 0.0
      %687 = vmatpush.msra.mxu0 0.0
      %688 = vmatpush.msra.mxu0 0.0
      %689 = vmatpush.msra.mxu0 0.0
      %690 = vmatpush.msra.mxu0 0.0
      %691 = vmatpush.msra.mxu0 0.0
      %692 = vmatpush.msra.mxu0 0.0
      %693 = vmatpush.msra.mxu0 0.0
      %694 = vmatpush.msra.mxu0 0.0
      %695 = vmatpush.msra.mxu0 0.0
      %696 = vmatpush.msra.mxu0 0.0
      %697 = vmatpush.msra.mxu0 0.0
      %698 = vmatpush.msra.mxu0 0.0
      %699 = vmatpush.msra.mxu0 0.0
      %700 = vmatpush.msra.mxu0 0.0
      %701 = vmatpush.msra.mxu0 %v644
      %702 = vmatmul.f32.gmra.mxu0 %v638
      %v703 = vpop.f32.mrf.mxu0
      %v704 = vadd.f32 0.0, %v703
      %705 = vdwg.mxu0
      %v706 = vadd.f32 %v613, %v664
      %v707 = vadd.f32 %v614, %v684
      %v708 = vadd.f32 %v615, %v704
      %v709 = vld [vmem:[%s164] sm:$0xff]
      %v710 = vld [vmem:[%s164 + $0x8] sm:$0xf]
      %s711 = scalar_lea.vmem %s1, 48
      %v712 = vld [vmem:[%s711] sm:$0xff]
      %715 = vst [vmem:[#allocation1] ss:$2 sm:$0xff] %v709
      %s716 = scalar_lea.vmem [#allocation1], 16
      %717 = vst [vmem:[%s716] ss:$2 sm:$0xff] %v710
      %v718 = vld.sshfl [vmem:[#allocation1] sm:$0xff pattern:$0x75316420]
      %v719 = vld.sshfl [vmem:[#allocation1 + $0x8] sm:$0xff pattern:$0x75316420]
      %v720 = vld.sshfl [vmem:[#allocation1 + $0x10] sm:$0xff pattern:$0x75316420]
      %721 = vrot.lane.b32.xlu0 %v718, 92
      %v722 = vpop.permute.xlu0 %721
      %723 = vrot.lane.b32.xlu0 %v719, 92
      %v724 = vpop.permute.xlu0 %723
      %725 = vrot.lane.b32.xlu0 %v720, 92
      %v726 = vpop.permute.xlu0 %725
      %vm727 = vcmask 752640
      %v728 = vsel %vm727, %v722, %v724
      %v729 = vsel %vm727, %v724, %v726
      %v731 = vsel %vm191, %v712, 0
      %v733 = vsel %vm195, %v728, 0
      %v735 = vsel %vm195, %v729, 0
      %v737 = vsel %vm195, %v726, 0
      %739 = vmatpush.msra.mxu0 0.0
      %740 = vmatpush.msra.mxu0 0.0
      %741 = vmatpush.msra.mxu0 0.0
      %742 = vmatpush.msra.mxu0 0.0
      %743 = vmatpush.msra.mxu0 0.0
      %744 = vmatpush.msra.mxu0 0.0
      %745 = vmatpush.msra.mxu0 0.0
      %746 = vmatpush.msra.mxu0 0.0
      %747 = vmatpush.msra.mxu0 0.0
      %748 = vmatpush.msra.mxu0 0.0
      %749 = vmatpush.msra.mxu0 0.0
      %750 = vmatpush.msra.mxu0 0.0
      %751 = vmatpush.msra.mxu0 0.0
      %752 = vmatpush.msra.mxu0 0.0
      %753 = vmatpush.msra.mxu0 0.0
      %754 = vmatpush.msra.mxu0 %v733
      %755 = vmatmul.f32.gmra.mxu0 %v731
      %v756 = vpop.f32.mrf.mxu0
      %v757 = vadd.f32 0.0, %v756
      %758 = vdwg.mxu0
      %759 = vmatpush.msra.mxu0 0.0
      %760 = vmatpush.msra.mxu0 0.0
      %761 = vmatpush.msra.mxu0 0.0
      %762 = vmatpush.msra.mxu0 0.0
      %763 = vmatpush.msra.mxu0 0.0
      %764 = vmatpush.msra.mxu0 0.0
      %765 = vmatpush.msra.mxu0 0.0
      %766 = vmatpush.msra.mxu0 0.0
      %767 = vmatpush.msra.mxu0 0.0
      %768 = vmatpush.msra.mxu0 0.0
      %769 = vmatpush.msra.mxu0 0.0
      %770 = vmatpush.msra.mxu0 0.0
      %771 = vmatpush.msra.mxu0 0.0
      %772 = vmatpush.msra.mxu0 0.0
      %773 = vmatpush.msra.mxu0 0.0
      %774 = vmatpush.msra.mxu0 %v735
      %775 = vmatmul.f32.gmra.mxu0 %v731
      %v776 = vpop.f32.mrf.mxu0
      %v777 = vadd.f32 0.0, %v776
      %778 = vdwg.mxu0
      %779 = vmatpush.msra.mxu0 0.0
      %780 = vmatpush.msra.mxu0 0.0
      %781 = vmatpush.msra.mxu0 0.0
      %782 = vmatpush.msra.mxu0 0.0
      %783 = vmatpush.msra.mxu0 0.0
      %784 = vmatpush.msra.mxu0 0.0
      %785 = vmatpush.msra.mxu0 0.0
      %786 = vmatpush.msra.mxu0 0.0
      %787 = vmatpush.msra.mxu0 0.0
      %788 = vmatpush.msra.mxu0 0.0
      %789 = vmatpush.msra.mxu0 0.0
      %790 = vmatpush.msra.mxu0 0.0
      %791 = vmatpush.msra.mxu0 0.0
      %792 = vmatpush.msra.mxu0 0.0
      %793 = vmatpush.msra.mxu0 0.0
      %794 = vmatpush.msra.mxu0 %v737
      %795 = vmatmul.f32.gmra.mxu0 %v731
      %v796 = vpop.f32.mrf.mxu0
      %v797 = vadd.f32 0.0, %v796
      %798 = vdwg.mxu0
      %v799 = vadd.f32 %v706, %v757
      %v800 = vadd.f32 %v707, %v777
      %v801 = vadd.f32 %v708, %v797
      %v802 = vld [vmem:[%s164] sm:$0xff]
      %v803 = vld [vmem:[%s164 + $0x8] sm:$0xf]
      %s804 = scalar_lea.vmem %s1, 56
      %v805 = vld [vmem:[%s804] sm:$0xff]
      %808 = vst [vmem:[#allocation1] ss:$2 sm:$0xff] %v802
      %s809 = scalar_lea.vmem [#allocation1], 16
      %810 = vst [vmem:[%s809] ss:$2 sm:$0xff] %v803
      %v811 = vld.sshfl [vmem:[#allocation1] sm:$0xff pattern:$0x75316420]
      %v812 = vld.sshfl [vmem:[#allocation1 + $0x8] sm:$0xff pattern:$0x75316420]
      %v813 = vld.sshfl [vmem:[#allocation1 + $0x10] sm:$0xff pattern:$0x75316420]
      %814 = vrot.lane.b32.xlu0 %v811, 91
      %v815 = vpop.permute.xlu0 %814
      %816 = vrot.lane.b32.xlu0 %v812, 91
      %v817 = vpop.permute.xlu0 %816
      %818 = vrot.lane.b32.xlu0 %v813, 91
      %v819 = vpop.permute.xlu0 %818
      %vm820 = vcmask 744448
      %v821 = vsel %vm820, %v815, %v817
      %v822 = vsel %vm820, %v817, %v819
      %v824 = vsel %vm191, %v805, 0
      %v826 = vsel %vm195, %v821, 0
      %v828 = vsel %vm195, %v822, 0
      %v830 = vsel %vm195, %v819, 0
      %832 = vmatpush.msra.mxu0 0.0
      %833 = vmatpush.msra.mxu0 0.0
      %834 = vmatpush.msra.mxu0 0.0
      %835 = vmatpush.msra.mxu0 0.0
      %836 = vmatpush.msra.mxu0 0.0
      %837 = vmatpush.msra.mxu0 0.0
      %838 = vmatpush.msra.mxu0 0.0
      %839 = vmatpush.msra.mxu0 0.0
      %840 = vmatpush.msra.mxu0 0.0
      %841 = vmatpush.msra.mxu0 0.0
      %842 = vmatpush.msra.mxu0 0.0
      %843 = vmatpush.msra.mxu0 0.0
      %844 = vmatpush.msra.mxu0 0.0
      %845 = vmatpush.msra.mxu0 0.0
      %846 = vmatpush.msra.mxu0 0.0
      %847 = vmatpush.msra.mxu0 %v826
      %848 = vmatmul.f32.gmra.mxu0 %v824
      %v849 = vpop.f32.mrf.mxu0
      %v850 = vadd.f32 0.0, %v849
      %851 = vdwg.mxu0
      %852 = vmatpush.msra.mxu0 0.0
      %853 = vmatpush.msra.mxu0 0.0
      %854 = vmatpush.msra.mxu0 0.0
      %855 = vmatpush.msra.mxu0 0.0
      %856 = vmatpush.msra.mxu0 0.0
      %857 = vmatpush.msra.mxu0 0.0
      %858 = vmatpush.msra.mxu0 0.0
      %859 = vmatpush.msra.mxu0 0.0
      %860 = vmatpush.msra.mxu0 0.0
      %861 = vmatpush.msra.mxu0 0.0
      %862 = vmatpush.msra.mxu0 0.0
      %863 = vmatpush.msra.mxu0 0.0
      %864 = vmatpush.msra.mxu0 0.0
      %865 = vmatpush.msra.mxu0 0.0
      %866 = vmatpush.msra.mxu0 0.0
      %867 = vmatpush.msra.mxu0 %v828
      %868 = vmatmul.f32.gmra.mxu0 %v824
      %v869 = vpop.f32.mrf.mxu0
      %v870 = vadd.f32 0.0, %v869
      %871 = vdwg.mxu0
      %872 = vmatpush.msra.mxu0 0.0
      %873 = vmatpush.msra.mxu0 0.0
      %874 = vmatpush.msra.mxu0 0.0
      %875 = vmatpush.msra.mxu0 0.0
      %876 = vmatpush.msra.mxu0 0.0
      %877 = vmatpush.msra.mxu0 0.0
      %878 = vmatpush.msra.mxu0 0.0
      %879 = vmatpush.msra.mxu0 0.0
      %880 = vmatpush.msra.mxu0 0.0
      %881 = vmatpush.msra.mxu0 0.0
      %882 = vmatpush.msra.mxu0 0.0
      %883 = vmatpush.msra.mxu0 0.0
      %884 = vmatpush.msra.mxu0 0.0
      %885 = vmatpush.msra.mxu0 0.0
      %886 = vmatpush.msra.mxu0 0.0
      %887 = vmatpush.msra.mxu0 %v830
      %888 = vmatmul.f32.gmra.mxu0 %v824
      %v889 = vpop.f32.mrf.mxu0
      %v890 = vadd.f32 0.0, %v889
      %891 = vdwg.mxu0
      %v892 = vadd.f32 %v799, %v850
      %v893 = vadd.f32 %v800, %v870
      %v894 = vadd.f32 %v801, %v890
      %v895 = vld [vmem:[%s164] sm:$0xff]
      %v896 = vld [vmem:[%s164 + $0x8] sm:$0xf]
      %s897 = scalar_lea.vmem %s1, 64
      %v898 = vld [vmem:[%s897] sm:$0xff]
      %901 = vst [vmem:[#allocation1] ss:$2 sm:$0xff] %v895
      %s902 = scalar_lea.vmem [#allocation1], 16
      %903 = vst [vmem:[%s902] ss:$2 sm:$0xff] %v896
      %v904 = vld.sshfl [vmem:[#allocation1] sm:$0xff pattern:$0x75316420]
      %v905 = vld.sshfl [vmem:[#allocation1 + $0x8] sm:$0xff pattern:$0x75316420]
      %v906 = vld.sshfl [vmem:[#allocation1 + $0x10] sm:$0xff pattern:$0x75316420]
      %907 = vrot.lane.b32.xlu0 %v904, 90
      %v908 = vpop.permute.xlu0 %907
      %909 = vrot.lane.b32.xlu0 %v905, 90
      %v910 = vpop.permute.xlu0 %909
      %911 = vrot.lane.b32.xlu0 %v906, 90
      %v912 = vpop.permute.xlu0 %911
      %vm913 = vcmask 736256
      %v914 = vsel %vm913, %v908, %v910
      %v915 = vsel %vm913, %v910, %v912
      %v917 = vsel %vm191, %v898, 0
      %v919 = vsel %vm195, %v914, 0
      %v921 = vsel %vm195, %v915, 0
      %v923 = vsel %vm195, %v912, 0
      %925 = vmatpush.msra.mxu0 0.0
      %926 = vmatpush.msra.mxu0 0.0
      %927 = vmatpush.msra.mxu0 0.0
      %928 = vmatpush.msra.mxu0 0.0
      %929 = vmatpush.msra.mxu0 0.0
      %930 = vmatpush.msra.mxu0 0.0
      %931 = vmatpush.msra.mxu0 0.0
      %932 = vmatpush.msra.mxu0 0.0
      %933 = vmatpush.msra.mxu0 0.0
      %934 = vmatpush.msra.mxu0 0.0
      %935 = vmatpush.msra.mxu0 0.0
      %936 = vmatpush.msra.mxu0 0.0
      %937 = vmatpush.msra.mxu0 0.0
      %938 = vmatpush.msra.mxu0 0.0
      %939 = vmatpush.msra.mxu0 0.0
      %940 = vmatpush.msra.mxu0 %v919
      %941 = vmatmul.f32.gmra.mxu0 %v917
      %v942 = vpop.f32.mrf.mxu0
      %v943 = vadd.f32 0.0, %v942
      %944 = vdwg.mxu0
      %945 = vmatpush.msra.mxu0 0.0
      %946 = vmatpush.msra.mxu0 0.0
      %947 = vmatpush.msra.mxu0 0.0
      %948 = vmatpush.msra.mxu0 0.0
      %949 = vmatpush.msra.mxu0 0.0
      %950 = vmatpush.msra.mxu0 0.0
      %951 = vmatpush.msra.mxu0 0.0
      %952 = vmatpush.msra.mxu0 0.0
      %953 = vmatpush.msra.mxu0 0.0
      %954 = vmatpush.msra.mxu0 0.0
      %955 = vmatpush.msra.mxu0 0.0
      %956 = vmatpush.msra.mxu0 0.0
      %957 = vmatpush.msra.mxu0 0.0
      %958 = vmatpush.msra.mxu0 0.0
      %959 = vmatpush.msra.mxu0 0.0
      %960 = vmatpush.msra.mxu0 %v921
      %961 = vmatmul.f32.gmra.mxu0 %v917
      %v962 = vpop.f32.mrf.mxu0
      %v963 = vadd.f32 0.0, %v962
      %964 = vdwg.mxu0
      %965 = vmatpush.msra.mxu0 0.0
      %966 = vmatpush.msra.mxu0 0.0
      %967 = vmatpush.msra.mxu0 0.0
      %968 = vmatpush.msra.mxu0 0.0
      %969 = vmatpush.msra.mxu0 0.0
      %970 = vmatpush.msra.mxu0 0.0
      %971 = vmatpush.msra.mxu0 0.0
      %972 = vmatpush.msra.mxu0 0.0
      %973 = vmatpush.msra.mxu0 0.0
      %974 = vmatpush.msra.mxu0 0.0
      %975 = vmatpush.msra.mxu0 0.0
      %976 = vmatpush.msra.mxu0 0.0
      %977 = vmatpush.msra.mxu0 0.0
      %978 = vmatpush.msra.mxu0 0.0
      %979 = vmatpush.msra.mxu0 0.0
      %980 = vmatpush.msra.mxu0 %v923
      %981 = vmatmul.f32.gmra.mxu0 %v917
      %v982 = vpop.f32.mrf.mxu0
      %v983 = vadd.f32 0.0, %v982
      %984 = vdwg.mxu0
      %v985 = vadd.f32 %v892, %v943
      %v986 = vadd.f32 %v893, %v963
      %v987 = vadd.f32 %v894, %v983
      %v988 = vld [vmem:[%s2] sm:$0x7]
      %v990 = vperm.slane %v988, 0
      %v991 = vperm.slane %v988, 1
      %v992 = vperm.slane %v988, 2
      %v996 = vmul.f32 %v985, %v990
      %v997 = vmul.f32 %v986, %v991
      %v998 = vmul.f32 %v987, %v992
      %v999 = vadd.f32 %v996, %v997
      %vm1000 = vcmask 261120
      %v1001 = vsel %vm1000, %v998, 0.0
      %v1002 = vadd.f32 %v999, %v1001
      %1003 = vadd.xlane.f32.xlu0 %v1002
      %v1004 = vpop.xlane.xlu0 %1003
      %vm1005 = vcmask 7168
      %1006 = vst.msk [vmem:[%s168] sm:$0xff] %vm1005, %v1004
      %v1007 = vmul.f32 %v996, %v996
      %v1008 = vmul.f32 %v997, %v997
      %v1009 = vmul.f32 %v998, %v998
      %v1010 = vadd.f32 %v1007, %v1008
      %v1011 = vsel %vm1000, %v1009, 0.0
      %v1012 = vadd.f32 %v1010, %v1011
      %1013 = vadd.xlane.f32.xlu0 %v1012
      %v1014 = vpop.xlane.xlu0 %1013
      %vm1015 = vcmask 15368
      %1016 = vst.msk [vmem:[%s168] sm:$0xff] %vm1015, %v1014
      %p1017 = scmp.lt.s32.totalorder %s14, 1
      %s1018 = scalar_select %p1017, %s14, 1
      %s1019 = smul.addr %s1018, 8
      %s1020 = scalar_lea.vmem %s3, %s1019
      // Predicated region
      $region33: #{fdconv_forward.2} parent=31 // pred_check
        %p1021 = pneg %p100
      $region34: #{fdconv_forward.2} parent=31 // pred_check_branch
        %1023 = sbr.rel (%p1021) target = $region36
      $region35: #{fdconv_forward.2} parent=31 // pred_region
        _
      $region36: #{fdconv_forward.2} parent=31 // pred_fallthru
        _
    $region32: #{fdconv_forward.2} parent=5 // pred_fallthru
      _
    %p1024 = scmp.le.s32.totalorder 2, %s9
    // Predicated region
    $region37: #{fdconv_forward.2} parent=5 // pred_check
      %p1025 = pneg %p1024
    $region38: #{fdconv_forward.2} parent=5 // pred_check_branch
      %1027 = sbr.rel (%p1025) target = $region40
    $region39: #{fdconv_forward.2} parent=5 // pred_region
      %s1028 = ssub.s32 %s9, 2
      // Predicated region
      $region41: #{fdconv_forward.2} parent=39 // pred_check
        %p1029 = pneg %p106
      $region42: #{fdconv_forward.2} parent=39 // pred_check_branch
        %1031 = sbr.rel (%p1029) target = $region44
      $region43: #{fdconv_forward.2} parent=39 // pred_region
        %p1032 = scmp.lt.s32.totalorder %s15, 1
        %s1033 = scalar_select %p1032, %s15, 1
        %s1034 = smul.addr %s1033, 8
        %s1035 = scalar_lea.vmem %s3, %s1034
      $region44: #{fdconv_forward.2} parent=39 // pred_fallthru
        _
    $region40: #{fdconv_forward.2} parent=5 // pred_fallthru
      _
  $region6: #{fdconv_forward.2} parent=0 // loop_footer
    %s13 = sadd.s32 1, %s9
  $region7: #{fdconv_forward.2} parent=0 // loop_footer_branch
    %8 = sbr.rel target = $region3
  $region8: #{fdconv_forward.2} parent=0 // loop_exit
    _

// kernel: fdconv_forward.3
$region0: #{fdconv_forward.3}
  #allocation0 [shape = 'u32[]', space=smem, size = 0x4, offset = 0x4, fixed_abs, tag = 'smem constant byte address 0x4 - core index']
  #allocation1 [shape = 'u32[72,128]{1,0:T(1,128)}', space=vmem, size = 0x9000, scoped, tag = 'internal scratch']
  %s0 = inlined_call_operand.vmem [shape: f32[2,4,326], index: 0, kind: input, shape index: {}]
  %s1 = inlined_call_operand.vmem [shape: f32[9,8,4], index: 1, kind: input, shape index: {}]
  %s2 = inlined_call_operand.vmem [shape: f32[8,2], index: 2, kind: input, shape index: {}]
  %s3 = inlined_call_operand.vmem [shape: f32[2,8,288], index: 3, kind: output, shape index: {}]
  %s4 = sld [smem:[#allocation0]]
  $region45: #{fdconv_forward.3} parent=0
    _
  %s6 = ssub.s32 1, %s4
  %s7 = scalar_select 0, %s6, %s4
  loop: start=0, step=1, limit=4
  $region2: #{fdconv_forward.3} parent=0 // loop_pre_header
    _
  $region3: #{fdconv_forward.3} parent=0 // loop_header
    %s9 = sphi 0, %s13
    %p10 = scmp.ge.s32.totalorder %s9, 4
    %s19 = sphi 0, %s21
    %s22 = sphi 0, %s19
    %s23 = sphi 0, %s22
    %s39 = sphi 0, %s23
    %s43 = sphi 0, %s43
    %s45 = sphi 0, %s43
    %s46 = sphi 0, %s45
    %s60 = sphi 0, %s46
    %s64 = sphi 0, %s64
    %s66 = sphi 0, %s64
    %s67 = sphi 0, %s66
    %s81 = sphi 0, %s67
    %s87 = sphi 0, %s89
    %s90 = sphi 0, %s87
    %s91 = sphi 0, %s90
    %s107 = sphi 0, %s91
  $region4: #{fdconv_forward.3} parent=0 // loop_header_branch
    %12 = sbr.rel (%p10) target = $region8
  $region5: #{fdconv_forward.3} parent=0 // loop_body
    %s14 = ssub.s32 %s9, 1
    %s15 = ssub.s32 %s9, 2
    %s16 = sadd.s32 %s9, 1
    %s17 = ssub.s32 %s9, %s16
    %p18 = scmp.eq.s32.totalorder %s17, 0
    %s20 = sadd.s32 %s19, 1
    %s21 = scalar_select %p18, %s19, %s20
    %p24 = pneg %p18
    %p25 = scmp.eq.s32.totalorder %s9, 1
    %p26 = por %p24, %p25
    %p27 = scmp.ne.s32.totalorder %s19, %s22
    %p28 = scmp.eq.s32.totalorder %s9, 0
    %p29 = por %p27, %p28
    %p30 = scmp.ne.s32.totalorder %s19, %s22
    %p31 = scmp.eq.s32.totalorder %s14, 1
    %p32 = por %p30, %p31
    %p33 = scmp.ne.s32.totalorder %s22, %s23
    %p34 = scmp.eq.s32.totalorder %s14, 0
    %p35 = por %p33, %p34
    %p36 = scmp.ne.s32.totalorder %s22, %s23
    %p37 = scmp.eq.s32.totalorder %s15, 1
    %p38 = por %p36, %p37
    %p40 = scmp.ne.s32.totalorder %s23, %s39
    %p41 = scmp.eq.s32.totalorder %s15, 0
    %p42 = por %p40, %p41
    %s44 = sadd.s32 %s43, 1
    %p47 = scmp.eq.s32.totalorder %s9, 1
    %p48 = scmp.ne.s32.totalorder %s43, %s45
    %p49 = scmp.eq.s32.totalorder %s9, 0
    %p50 = por %p48, %p49
    %p51 = scmp.ne.s32.totalorder %s43, %s45
    %p52 = scmp.eq.s32.totalorder %s14, 1
    %p53 = por %p51, %p52
    %p54 = scmp.ne.s32.totalorder %s45, %s46
    %p55 = scmp.eq.s32.totalorder %s14, 0
    %p56 = por %p54, %p55
    %p57 = scmp.ne.s32.totalorder %s45, %s46
    %p58 = scmp.eq.s32.totalorder %s15, 1
    %p59 = por %p57, %p58
    %p61 = scmp.ne.s32.totalorder %s46, %s60
    %p62 = scmp.eq.s32.totalorder %s15, 0
    %p63 = por %p61, %p62
    %s65 = sadd.s32 %s64, 1
    %p68 = scmp.eq.s32.totalorder %s9, 1
    %p69 = scmp.ne.s32.totalorder %s64, %s66
    %p70 = scmp.eq.s32.totalorder %s9, 0
    %p71 = por %p69, %p70
    %p72 = scmp.ne.s32.totalorder %s64, %s66
    %p73 = scmp.eq.s32.totalorder %s14, 1
    %p74 = por %p72, %p73
    %p75 = scmp.ne.s32.totalorder %s66, %s67
    %p76 = scmp.eq.s32.totalorder %s14, 0
    %p77 = por %p75, %p76
    %p78 = scmp.ne.s32.totalorder %s66, %s67
    %p79 = scmp.eq.s32.totalorder %s15, 1
    %p80 = por %p78, %p79
    %p82 = scmp.ne.s32.totalorder %s67, %s81
    %p83 = scmp.eq.s32.totalorder %s15, 0
    %p84 = por %p82, %p83
    %s85 = ssub.s32 %s9, %s16
    %p86 = scmp.eq.s32.totalorder %s85, 0
    %s88 = sadd.s32 %s87, 1
    %s89 = scalar_select %p86, %s87, %s88
    %p92 = pneg %p86
    %p93 = scmp.eq.s32.totalorder %s9, 1
    %p94 = por %p92, %p93
    %p95 = scmp.ne.s32.totalorder %s87, %s90
    %p96 = scmp.eq.s32.totalorder %s9, 0
    %p97 = por %p95, %p96
    %p98 = scmp.ne.s32.totalorder %s87, %s90
    %p99 = scmp.eq.s32.totalorder %s14, 1
    %p100 = por %p98, %p99
    %p101 = scmp.ne.s32.totalorder %s90, %s91
    %p102 = scmp.eq.s32.totalorder %s14, 0
    %p103 = por %p101, %p102
    %p104 = scmp.ne.s32.totalorder %s90, %s91
    %p105 = scmp.eq.s32.totalorder %s15, 1
    %p106 = por %p104, %p105
    %p108 = scmp.ne.s32.totalorder %s91, %s107
    %p109 = scmp.eq.s32.totalorder %s15, 0
    %p110 = por %p108, %p109
    %p111 = scmp.le.s32.totalorder 1, %s9
    %p112 = scmp.lt.s32.totalorder %s9, 3
    %p113 = pnand %p111, %p112
    %p114 = pneg %p113
    // Predicated region
    $region9: #{fdconv_forward.3} parent=5 // pred_check
      _
    $region10: #{fdconv_forward.3} parent=5 // pred_check_branch
      %116 = sbr.rel (%p113) target = $region12
    $region11: #{fdconv_forward.3} parent=5 // pred_region
      %s117 = ssub.s32 %s9, 1
      // Predicated region
      $region13: #{fdconv_forward.3} parent=11 // pred_check
        %p118 = pneg %p56
      $region14: #{fdconv_forward.3} parent=11 // pred_check_branch
        %120 = sbr.rel (%p118) target = $region16
      $region15: #{fdconv_forward.3} parent=11 // pred_region
        _
      $region16: #{fdconv_forward.3} parent=11 // pred_fallthru
        _
      // Predicated region
      $region17: #{fdconv_forward.3} parent=11 // pred_check
        %p121 = pneg %p77
      $region18: #{fdconv_forward.3} parent=11 // pred_check_branch
        %123 = sbr.rel (%p121) target = $region20
      $region19: #{fdconv_forward.3} parent=11 // pred_region
        _
      $region20: #{fdconv_forward.3} parent=11 // pred_fallthru
        _
    $region12: #{fdconv_forward.3} parent=5 // pred_fallthru
      _
    %p124 = scmp.lt.s32.totalorder %s9, 2
    // Predicated region
    $region21: #{fdconv_forward.3} parent=5 // pred_check
      %p125 = pneg %p124
    $region22: #{fdconv_forward.3} parent=5 // pred_check_branch
      %127 = sbr.rel (%p125) target = $region24
    $region23: #{fdconv_forward.3} parent=5 // pred_region
      // Predicated region
      $region25: #{fdconv_forward.3} parent=23 // pred_check
        %p128 = pneg %p29
      $region26: #{fdconv_forward.3} parent=23 // pred_check_branch
        %130 = sbr.rel (%p128) target = $region28
      $region27: #{fdconv_forward.3} parent=23 // pred_region
        %p131 = scmp.lt.s32.totalorder %s9, 1
        %s132 = scalar_select %p131, %s9, 1
        %s133 = smul.addr %s132, 3
        %s134 = smul.addr %s133, 4
        %s135 = scalar_lea.vmem %s0, %s134
      $region28: #{fdconv_forward.3} parent=23 // pred_fallthru
        _
    $region24: #{fdconv_forward.3} parent=5 // pred_fallthru
      _
    %p136 = scmp.le.s32.totalorder 1, %s9
    %p137 = scmp.lt.s32.totalorder %s9, 3
    %p138 = pnand %p136, %p137
    %p139 = pneg %p138
    // Predicated region
    $region29: #{fdconv_forward.3} parent=5 // pred_check
      _
    $region30: #{fdconv_forward.3} parent=5 // pred_check_branch
      %141 = sbr.rel (%p138) target = $region32
    $region31: #{fdconv_forward.3} parent=5 // pred_region
      %s142 = ssub.s32 %s9, 1
      %p143 = scmp.lt.s32.totalorder %s14, 1
      %s144 = scalar_select %p143, %s14, 1
      %s145 = smul.addr %s144, 3
      %s146 = smul.addr %s145, 4
      %s147 = scalar_lea.vmem %s0, %s146
      %p148 = pneg %p35
      %p149 = pneg %p32
      %p150 = pneg %p56
      %p151 = pneg %p53
      %p152 = pneg %p77
      %p153 = pneg %p74
      %p154 = pneg %p103
      %p155 = pneg %p100
      %p156 = scmp.lt.s32.totalorder %s14, 1
      %s157 = scalar_select %p156, %s14, 1
      %s158 = smul.addr %s157, 3
      %s159 = smul.addr %s158, 8
      %s160 = scalar_lea.vmem %s3, %s159
      %p161 = scmp.lt.s32.totalorder %s14, 1
      %s162 = scalar_select %p161, %s14, 1
      %s163 = smul.addr %s162, 3
      %s164 = smul.addr %s163, 4
      %s165 = scalar_lea.vmem %s0, %s164
      %p166 = scmp.lt.s32.totalorder %s14, 1
      %s167 = scalar_select %p166, %s14, 1
      %s168 = smul.addr %s167, 3
      %s169 = smul.addr %s168, 8
      %s170 = scalar_lea.vmem %s3, %s169
      %v171 = vld [vmem:[%s165] sm:$0xff]
      %v172 = vld [vmem:[%s165 + $0x8] sm:$0xf]
      %v173 = vld [vmem:[%s1] sm:$0xff]
      %s174 = scalar_lea.vmem %s1, 8
      %v175 = vld [vmem:[%s174] sm:$0xff]
      %178 = vst [vmem:[#allocation1] ss:$2 sm:$0xff] %v171
      %s179 = scalar_lea.vmem [#allocation1], 16
      %180 = vst [vmem:[%s179] ss:$2 sm:$0xff] %v172
      %v181 = vld.sshfl [vmem:[#allocation1] sm:$0xff pattern:$0x75316420]
      %v182 = vld.sshfl [vmem:[#allocation1 + $0x8] sm:$0xff pattern:$0x75316420]
      %v183 = vld.sshfl [vmem:[#allocation1 + $0x10] sm:$0xff pattern:$0x75316420]
      %184 = vrot.lane.b32.xlu0 %v181, 127
      %v185 = vpop.permute.xlu0 %184
      %186 = vrot.lane.b32.xlu0 %v182, 127
      %v187 = vpop.permute.xlu0 %186
      %188 = vrot.lane.b32.xlu0 %v183, 127
      %v189 = vpop.permute.xlu0 %188
      %vm190 = vcmask 1039360
      %v191 = vsel %vm190, %v185, %v187
      %v192 = vsel %vm190, %v187, %v189
      %vm193 = vcmask 31744
      %v195 = vsel %vm193, %v175, 0
      %vm197 = vcmask 1043456
      %v198 = vsel %vm197, %v191, 0
      %v200 = vsel %vm197, %v192, 0
      %v202 = vsel %vm197, %v189, 0
      %204 = vmatpush.msra.mxu0 0.0
      %205 = vmatpush.msra.mxu0 0.0
      %206 = vmatpush.msra.mxu0 0.0
      %207 = vmatpush.msra.mxu0 0.0
      %208 = vmatpush.msra.mxu0 0.0
      %209 = vmatpush.msra.mxu0 0.0
      %210 = vmatpush.msra.mxu0 0.0
      %211 = vmatpush.msra.mxu0 0.0
      %212 = vmatpush.msra.mxu0 0.0
      %213 = vmatpush.msra.mxu0 0.0
      %214 = vmatpush.msra.mxu0 0.0
      %215 = vmatpush.msra.mxu0 0.0
      %216 = vmatpush.msra.mxu0 0.0
      %217 = vmatpush.msra.mxu0 0.0
      %218 = vmatpush.msra.mxu0 0.0
      %219 = vmatpush.msra.mxu0 %v198
      %220 = vmatmul.f32.gmra.mxu0 %v195
      %v221 = vpop.f32.mrf.mxu0
      %v222 = vadd.f32 0.0, %v221
      %223 = vdwg.mxu0
      %224 = vmatpush.msra.mxu0 0.0
      %225 = vmatpush.msra.mxu0 0.0
      %226 = vmatpush.msra.mxu0 0.0
      %227 = vmatpush.msra.mxu0 0.0
      %228 = vmatpush.msra.mxu0 0.0
      %229 = vmatpush.msra.mxu0 0.0
      %230 = vmatpush.msra.mxu0 0.0
      %231 = vmatpush.msra.mxu0 0.0
      %232 = vmatpush.msra.mxu0 0.0
      %233 = vmatpush.msra.mxu0 0.0
      %234 = vmatpush.msra.mxu0 0.0
      %235 = vmatpush.msra.mxu0 0.0
      %236 = vmatpush.msra.mxu0 0.0
      %237 = vmatpush.msra.mxu0 0.0
      %238 = vmatpush.msra.mxu0 0.0
      %239 = vmatpush.msra.mxu0 %v200
      %240 = vmatmul.f32.gmra.mxu0 %v195
      %v241 = vpop.f32.mrf.mxu0
      %v242 = vadd.f32 0.0, %v241
      %243 = vdwg.mxu0
      %244 = vmatpush.msra.mxu0 0.0
      %245 = vmatpush.msra.mxu0 0.0
      %246 = vmatpush.msra.mxu0 0.0
      %247 = vmatpush.msra.mxu0 0.0
      %248 = vmatpush.msra.mxu0 0.0
      %249 = vmatpush.msra.mxu0 0.0
      %250 = vmatpush.msra.mxu0 0.0
      %251 = vmatpush.msra.mxu0 0.0
      %252 = vmatpush.msra.mxu0 0.0
      %253 = vmatpush.msra.mxu0 0.0
      %254 = vmatpush.msra.mxu0 0.0
      %255 = vmatpush.msra.mxu0 0.0
      %256 = vmatpush.msra.mxu0 0.0
      %257 = vmatpush.msra.mxu0 0.0
      %258 = vmatpush.msra.mxu0 0.0
      %259 = vmatpush.msra.mxu0 %v202
      %260 = vmatmul.f32.gmra.mxu0 %v195
      %v261 = vpop.f32.mrf.mxu0
      %v262 = vadd.f32 0.0, %v261
      %263 = vdwg.mxu0
      %264 = vst [vmem:[#allocation1] ss:$2 sm:$0xff] %v171
      %s265 = scalar_lea.vmem [#allocation1], 16
      %266 = vst [vmem:[%s265] ss:$2 sm:$0xff] %v172
      %v267 = vld.sshfl [vmem:[#allocation1] sm:$0xff pattern:$0x75316420]
      %v268 = vld.sshfl [vmem:[#allocation1 + $0x8] sm:$0xff pattern:$0x75316420]
      %v269 = vld.sshfl [vmem:[#allocation1 + $0x10] sm:$0xff pattern:$0x75316420]
      %v271 = vsel %vm193, %v173, 0
      %v273 = vsel %vm197, %v267, 0
      %v275 = vsel %vm197, %v268, 0
      %v277 = vsel %vm197, %v269, 0
      %279 = vmatpush.msra.mxu0 0.0
      %280 = vmatpush.msra.mxu0 0.0
      %281 = vmatpush.msra.mxu0 0.0
      %282 = vmatpush.msra.mxu0 0.0
      %283 = vmatpush.msra.mxu0 0.0
      %284 = vmatpush.msra.mxu0 0.0
      %285 = vmatpush.msra.mxu0 0.0
      %286 = vmatpush.msra.mxu0 0.0
      %287 = vmatpush.msra.mxu0 0.0
      %288 = vmatpush.msra.mxu0 0.0
      %289 = vmatpush.msra.mxu0 0.0
      %290 = vmatpush.msra.mxu0 0.0
      %291 = vmatpush.msra.mxu0 0.0
      %292 = vmatpush.msra.mxu0 0.0
      %293 = vmatpush.msra.mxu0 0.0
      %294 = vmatpush.msra.mxu0 %v273
      %295 = vmatmul.f32.gmra.mxu0 %v271
      %v296 = vpop.f32.mrf.mxu0
      %v297 = vadd.f32 %v222, %v296
      %298 = vdwg.mxu0
      %299 = vmatpush.msra.mxu0 0.0
      %300 = vmatpush.msra.mxu0 0.0
      %301 = vmatpush.msra.mxu0 0.0
      %302 = vmatpush.msra.mxu0 0.0
      %303 = vmatpush.msra.mxu0 0.0
      %304 = vmatpush.msra.mxu0 0.0
      %305 = vmatpush.msra.mxu0 0.0
      %306 = vmatpush.msra.mxu0 0.0
      %307 = vmatpush.msra.mxu0 0.0
      %308 = vmatpush.msra.mxu0 0.0
      %309 = vmatpush.msra.mxu0 0.0
      %310 = vmatpush.msra.mxu0 0.0
      %311 = vmatpush.msra.mxu0 0.0
      %312 = vmatpush.msra.mxu0 0.0
      %313 = vmatpush.msra.mxu0 0.0
      %314 = vmatpush.msra.mxu0 %v275
      %315 = vmatmul.f32.gmra.mxu0 %v271
      %v316 = vpop.f32.mrf.mxu0
      %v317 = vadd.f32 %v242, %v316
      %318 = vdwg.mxu0
      %319 = vmatpush.msra.mxu0 0.0
      %320 = vmatpush.msra.mxu0 0.0
      %321 = vmatpush.msra.mxu0 0.0
      %322 = vmatpush.msra.mxu0 0.0
      %323 = vmatpush.msra.mxu0 0.0
      %324 = vmatpush.msra.mxu0 0.0
      %325 = vmatpush.msra.mxu0 0.0
      %326 = vmatpush.msra.mxu0 0.0
      %327 = vmatpush.msra.mxu0 0.0
      %328 = vmatpush.msra.mxu0 0.0
      %329 = vmatpush.msra.mxu0 0.0
      %330 = vmatpush.msra.mxu0 0.0
      %331 = vmatpush.msra.mxu0 0.0
      %332 = vmatpush.msra.mxu0 0.0
      %333 = vmatpush.msra.mxu0 0.0
      %334 = vmatpush.msra.mxu0 %v277
      %335 = vmatmul.f32.gmra.mxu0 %v271
      %v336 = vpop.f32.mrf.mxu0
      %v337 = vadd.f32 %v262, %v336
      %338 = vdwg.mxu0
      %v339 = vld [vmem:[%s165] sm:$0xff]
      %v340 = vld [vmem:[%s165 + $0x8] sm:$0xf]
      %s341 = scalar_lea.vmem %s1, 16
      %v342 = vld [vmem:[%s341] sm:$0xff]
      %345 = vst [vmem:[#allocation1] ss:$2 sm:$0xff] %v339
      %s346 = scalar_lea.vmem [#allocation1], 16
      %347 = vst [vmem:[%s346] ss:$2 sm:$0xff] %v340
      %v348 = vld.sshfl [vmem:[#allocation1] sm:$0xff pattern:$0x75316420]
      %v349 = vld.sshfl [vmem:[#allocation1 + $0x8] sm:$0xff pattern:$0x75316420]
      %v350 = vld.sshfl [vmem:[#allocation1 + $0x10] sm:$0xff pattern:$0x75316420]
      %351 = vrot.lane.b32.xlu0 %v348, 126
      %v352 = vpop.permute.xlu0 %351
      %353 = vrot.lane.b32.xlu0 %v349, 126
      %v354 = vpop.permute.xlu0 %353
      %355 = vrot.lane.b32.xlu0 %v350, 126
      %v356 = vpop.permute.xlu0 %355
      %vm357 = vcmask 1031168
      %v358 = vsel %vm357, %v352, %v354
      %v359 = vsel %vm357, %v354, %v356
      %v361 = vsel %vm193, %v342, 0
      %v363 = vsel %vm197, %v358, 0
      %v365 = vsel %vm197, %v359, 0
      %v367 = vsel %vm197, %v356, 0
      %369 = vmatpush.msra.mxu0 0.0
      %370 = vmatpush.msra.mxu0 0.0
      %371 = vmatpush.msra.mxu0 0.0
      %372 = vmatpush.msra.mxu0 0.0
      %373 = vmatpush.msra.mxu0 0.0
      %374 = vmatpush.msra.mxu0 0.0
      %375 = vmatpush.msra.mxu0 0.0
      %376 = vmatpush.msra.mxu0 0.0
      %377 = vmatpush.msra.mxu0 0.0
      %378 = vmatpush.msra.mxu0 0.0
      %379 = vmatpush.msra.mxu0 0.0
      %380 = vmatpush.msra.mxu0 0.0
      %381 = vmatpush.msra.mxu0 0.0
      %382 = vmatpush.msra.mxu0 0.0
      %383 = vmatpush.msra.mxu0 0.0
      %384 = vmatpush.msra.mxu0 %v363
      %385 = vmatmul.f32.gmra.mxu0 %v361
      %v386 = vpop.f32.mrf.mxu0
      %v387 = vadd.f32 0.0, %v386
      %388 = vdwg.mxu0
      %389 = vmatpush.msra.mxu0 0.0
      %390 = vmatpush.msra.mxu0 0.0
      %391 = vmatpush.msra.mxu0 0.0
      %392 = vmatpush.msra.mxu0 0.0
      %393 = vmatpush.msra.mxu0 0.0
      %394 = vmatpush.msra.mxu0 0.0
      %395 = vmatpush.msra.mxu0 0.0
      %396 = vmatpush.msra.mxu0 0.0
      %397 = vmatpush.msra.mxu0 0.0
      %398 = vmatpush.msra.mxu0 0.0
      %399 = vmatpush.msra.mxu0 0.0
      %400 = vmatpush.msra.mxu0 0.0
      %401 = vmatpush.msra.mxu0 0.0
      %402 = vmatpush.msra.mxu0 0.0
      %403 = vmatpush.msra.mxu0 0.0
      %404 = vmatpush.msra.mxu0 %v365
      %405 = vmatmul.f32.gmra.mxu0 %v361
      %v406 = vpop.f32.mrf.mxu0
      %v407 = vadd.f32 0.0, %v406
      %408 = vdwg.mxu0
      %409 = vmatpush.msra.mxu0 0.0
      %410 = vmatpush.msra.mxu0 0.0
      %411 = vmatpush.msra.mxu0 0.0
      %412 = vmatpush.msra.mxu0 0.0
      %413 = vmatpush.msra.mxu0 0.0
      %414 = vmatpush.msra.mxu0 0.0
      %415 = vmatpush.msra.mxu0 0.0
      %416 = vmatpush.msra.mxu0 0.0
      %417 = vmatpush.msra.mxu0 0.0
      %418 = vmatpush.msra.mxu0 0.0
      %419 = vmatpush.msra.mxu0 0.0
      %420 = vmatpush.msra.mxu0 0.0
      %421 = vmatpush.msra.mxu0 0.0
      %422 = vmatpush.msra.mxu0 0.0
      %423 = vmatpush.msra.mxu0 0.0
      %424 = vmatpush.msra.mxu0 %v367
      %425 = vmatmul.f32.gmra.mxu0 %v361
      %v426 = vpop.f32.mrf.mxu0
      %v427 = vadd.f32 0.0, %v426
      %428 = vdwg.mxu0
      %v429 = vadd.f32 %v297, %v387
      %v430 = vadd.f32 %v317, %v407
      %v431 = vadd.f32 %v337, %v427
      %v432 = vld [vmem:[%s165] sm:$0xff]
      %v433 = vld [vmem:[%s165 + $0x8] sm:$0xf]
      %s434 = scalar_lea.vmem %s1, 24
      %v435 = vld [vmem:[%s434] sm:$0xff]
      %438 = vst [vmem:[#allocation1] ss:$2 sm:$0xff] %v432
      %s439 = scalar_lea.vmem [#allocation1], 16
      %440 = vst [vmem:[%s439] ss:$2 sm:$0xff] %v433
      %v441 = vld.sshfl [vmem:[#allocation1] sm:$0xff pattern:$0x75316420]
      %v442 = vld.sshfl [vmem:[#allocation1 + $0x8] sm:$0xff pattern:$0x75316420]
      %v443 = vld.sshfl [vmem:[#allocation1 + $0x10] sm:$0xff pattern:$0x75316420]
      %444 = vrot.lane.b32.xlu0 %v441, 110
      %v445 = vpop.permute.xlu0 %444
      %446 = vrot.lane.b32.xlu0 %v442, 110
      %v447 = vpop.permute.xlu0 %446
      %448 = vrot.lane.b32.xlu0 %v443, 110
      %v449 = vpop.permute.xlu0 %448
      %vm450 = vcmask 900096
      %v451 = vsel %vm450, %v445, %v447
      %v452 = vsel %vm450, %v447, %v449
      %v454 = vsel %vm193, %v435, 0
      %v456 = vsel %vm197, %v451, 0
      %v458 = vsel %vm197, %v452, 0
      %v460 = vsel %vm197, %v449, 0
      %462 = vmatpush.msra.mxu0 0.0
      %463 = vmatpush.msra.mxu0 0.0
      %464 = vmatpush.msra.mxu0 0.0
      %465 = vmatpush.msra.mxu0 0.0
      %466 = vmatpush.msra.mxu0 0.0
      %467 = vmatpush.msra.mxu0 0.0
      %468 = vmatpush.msra.mxu0 0.0
      %469 = vmatpush.msra.mxu0 0.0
      %470 = vmatpush.msra.mxu0 0.0
      %471 = vmatpush.msra.mxu0 0.0
      %472 = vmatpush.msra.mxu0 0.0
      %473 = vmatpush.msra.mxu0 0.0
      %474 = vmatpush.msra.mxu0 0.0
      %475 = vmatpush.msra.mxu0 0.0
      %476 = vmatpush.msra.mxu0 0.0
      %477 = vmatpush.msra.mxu0 %v456
      %478 = vmatmul.f32.gmra.mxu0 %v454
      %v479 = vpop.f32.mrf.mxu0
      %v480 = vadd.f32 0.0, %v479
      %481 = vdwg.mxu0
      %482 = vmatpush.msra.mxu0 0.0
      %483 = vmatpush.msra.mxu0 0.0
      %484 = vmatpush.msra.mxu0 0.0
      %485 = vmatpush.msra.mxu0 0.0
      %486 = vmatpush.msra.mxu0 0.0
      %487 = vmatpush.msra.mxu0 0.0
      %488 = vmatpush.msra.mxu0 0.0
      %489 = vmatpush.msra.mxu0 0.0
      %490 = vmatpush.msra.mxu0 0.0
      %491 = vmatpush.msra.mxu0 0.0
      %492 = vmatpush.msra.mxu0 0.0
      %493 = vmatpush.msra.mxu0 0.0
      %494 = vmatpush.msra.mxu0 0.0
      %495 = vmatpush.msra.mxu0 0.0
      %496 = vmatpush.msra.mxu0 0.0
      %497 = vmatpush.msra.mxu0 %v458
      %498 = vmatmul.f32.gmra.mxu0 %v454
      %v499 = vpop.f32.mrf.mxu0
      %v500 = vadd.f32 0.0, %v499
      %501 = vdwg.mxu0
      %502 = vmatpush.msra.mxu0 0.0
      %503 = vmatpush.msra.mxu0 0.0
      %504 = vmatpush.msra.mxu0 0.0
      %505 = vmatpush.msra.mxu0 0.0
      %506 = vmatpush.msra.mxu0 0.0
      %507 = vmatpush.msra.mxu0 0.0
      %508 = vmatpush.msra.mxu0 0.0
      %509 = vmatpush.msra.mxu0 0.0
      %510 = vmatpush.msra.mxu0 0.0
      %511 = vmatpush.msra.mxu0 0.0
      %512 = vmatpush.msra.mxu0 0.0
      %513 = vmatpush.msra.mxu0 0.0
      %514 = vmatpush.msra.mxu0 0.0
      %515 = vmatpush.msra.mxu0 0.0
      %516 = vmatpush.msra.mxu0 0.0
      %517 = vmatpush.msra.mxu0 %v460
      %518 = vmatmul.f32.gmra.mxu0 %v454
      %v519 = vpop.f32.mrf.mxu0
      %v520 = vadd.f32 0.0, %v519
      %521 = vdwg.mxu0
      %v522 = vadd.f32 %v429, %v480
      %v523 = vadd.f32 %v430, %v500
      %v524 = vadd.f32 %v431, %v520
      %v525 = vld [vmem:[%s165] sm:$0xff]
      %v526 = vld [vmem:[%s165 + $0x8] sm:$0xf]
      %s527 = scalar_lea.vmem %s1, 32
      %v528 = vld [vmem:[%s527] sm:$0xff]
      %531 = vst [vmem:[#allocation1] ss:$2 sm:$0xff] %v525
      %s532 = scalar_lea.vmem [#allocation1], 16
      %533 = vst [vmem:[%s532] ss:$2 sm:$0xff] %v526
      %v534 = vld.sshfl [vmem:[#allocation1] sm:$0xff pattern:$0x75316420]
      %v535 = vld.sshfl [vmem:[#allocation1 + $0x8] sm:$0xff pattern:$0x75316420]
      %v536 = vld.sshfl [vmem:[#allocation1 + $0x10] sm:$0xff pattern:$0x75316420]
      %537 = vrot.lane.b32.xlu0 %v534, 109
      %v538 = vpop.permute.xlu0 %537
      %539 = vrot.lane.b32.xlu0 %v535, 109
      %v540 = vpop.permute.xlu0 %539
      %541 = vrot.lane.b32.xlu0 %v536, 109
      %v542 = vpop.permute.xlu0 %541
      %vm543 = vcmask 891904
      %v544 = vsel %vm543, %v538, %v540
      %v545 = vsel %vm543, %v540, %v542
      %v547 = vsel %vm193, %v528, 0
      %v549 = vsel %vm197, %v544, 0
      %v551 = vsel %vm197, %v545, 0
      %v553 = vsel %vm197, %v542, 0
      %555 = vmatpush.msra.mxu0 0.0
      %556 = vmatpush.msra.mxu0 0.0
      %557 = vmatpush.msra.mxu0 0.0
      %558 = vmatpush.msra.mxu0 0.0
      %559 = vmatpush.msra.mxu0 0.0
      %560 = vmatpush.msra.mxu0 0.0
      %561 = vmatpush.msra.mxu0 0.0
      %562 = vmatpush.msra.mxu0 0.0
      %563 = vmatpush.msra.mxu0 0.0
      %564 = vmatpush.msra.mxu0 0.0
      %565 = vmatpush.msra.mxu0 0.0
      %566 = vmatpush.msra.mxu0 0.0
      %567 = vmatpush.msra.mxu0 0.0
      %568 = vmatpush.msra.mxu0 0.0
      %569 = vmatpush.msra.mxu0 0.0
      %570 = vmatpush.msra.mxu0 %v549
      %571 = vmatmul.f32.gmra.mxu0 %v547
      %v572 = vpop.f32.mrf.mxu0
      %v573 = vadd.f32 0.0, %v572
      %574 = vdwg.mxu0
      %575 = vmatpush.msra.mxu0 0.0
      %576 = vmatpush.msra.mxu0 0.0
      %577 = vmatpush.msra.mxu0 0.0
      %578 = vmatpush.msra.mxu0 0.0
      %579 = vmatpush.msra.mxu0 0.0
      %580 = vmatpush.msra.mxu0 0.0
      %581 = vmatpush.msra.mxu0 0.0
      %582 = vmatpush.msra.mxu0 0.0
      %583 = vmatpush.msra.mxu0 0.0
      %584 = vmatpush.msra.mxu0 0.0
      %585 = vmatpush.msra.mxu0 0.0
      %586 = vmatpush.msra.mxu0 0.0
      %587 = vmatpush.msra.mxu0 0.0
      %588 = vmatpush.msra.mxu0 0.0
      %589 = vmatpush.msra.mxu0 0.0
      %590 = vmatpush.msra.mxu0 %v551
      %591 = vmatmul.f32.gmra.mxu0 %v547
      %v592 = vpop.f32.mrf.mxu0
      %v593 = vadd.f32 0.0, %v592
      %594 = vdwg.mxu0
      %595 = vmatpush.msra.mxu0 0.0
      %596 = vmatpush.msra.mxu0 0.0
      %597 = vmatpush.msra.mxu0 0.0
      %598 = vmatpush.msra.mxu0 0.0
      %599 = vmatpush.msra.mxu0 0.0
      %600 = vmatpush.msra.mxu0 0.0
      %601 = vmatpush.msra.mxu0 0.0
      %602 = vmatpush.msra.mxu0 0.0
      %603 = vmatpush.msra.mxu0 0.0
      %604 = vmatpush.msra.mxu0 0.0
      %605 = vmatpush.msra.mxu0 0.0
      %606 = vmatpush.msra.mxu0 0.0
      %607 = vmatpush.msra.mxu0 0.0
      %608 = vmatpush.msra.mxu0 0.0
      %609 = vmatpush.msra.mxu0 0.0
      %610 = vmatpush.msra.mxu0 %v553
      %611 = vmatmul.f32.gmra.mxu0 %v547
      %v612 = vpop.f32.mrf.mxu0
      %v613 = vadd.f32 0.0, %v612
      %614 = vdwg.mxu0
      %v615 = vadd.f32 %v522, %v573
      %v616 = vadd.f32 %v523, %v593
      %v617 = vadd.f32 %v524, %v613
      %v618 = vld [vmem:[%s165] sm:$0xff]
      %v619 = vld [vmem:[%s165 + $0x8] sm:$0xf]
      %s620 = scalar_lea.vmem %s1, 40
      %v621 = vld [vmem:[%s620] sm:$0xff]
      %624 = vst [vmem:[#allocation1] ss:$2 sm:$0xff] %v618
      %s625 = scalar_lea.vmem [#allocation1], 16
      %626 = vst [vmem:[%s625] ss:$2 sm:$0xff] %v619
      %v627 = vld.sshfl [vmem:[#allocation1] sm:$0xff pattern:$0x75316420]
      %v628 = vld.sshfl [vmem:[#allocation1 + $0x8] sm:$0xff pattern:$0x75316420]
      %v629 = vld.sshfl [vmem:[#allocation1 + $0x10] sm:$0xff pattern:$0x75316420]
      %630 = vrot.lane.b32.xlu0 %v627, 108
      %v631 = vpop.permute.xlu0 %630
      %632 = vrot.lane.b32.xlu0 %v628, 108
      %v633 = vpop.permute.xlu0 %632
      %634 = vrot.lane.b32.xlu0 %v629, 108
      %v635 = vpop.permute.xlu0 %634
      %vm636 = vcmask 883712
      %v637 = vsel %vm636, %v631, %v633
      %v638 = vsel %vm636, %v633, %v635
      %v640 = vsel %vm193, %v621, 0
      %v642 = vsel %vm197, %v637, 0
      %v644 = vsel %vm197, %v638, 0
      %v646 = vsel %vm197, %v635, 0
      %648 = vmatpush.msra.mxu0 0.0
      %649 = vmatpush.msra.mxu0 0.0
      %650 = vmatpush.msra.mxu0 0.0
      %651 = vmatpush.msra.mxu0 0.0
      %652 = vmatpush.msra.mxu0 0.0
      %653 = vmatpush.msra.mxu0 0.0
      %654 = vmatpush.msra.mxu0 0.0
      %655 = vmatpush.msra.mxu0 0.0
      %656 = vmatpush.msra.mxu0 0.0
      %657 = vmatpush.msra.mxu0 0.0
      %658 = vmatpush.msra.mxu0 0.0
      %659 = vmatpush.msra.mxu0 0.0
      %660 = vmatpush.msra.mxu0 0.0
      %661 = vmatpush.msra.mxu0 0.0
      %662 = vmatpush.msra.mxu0 0.0
      %663 = vmatpush.msra.mxu0 %v642
      %664 = vmatmul.f32.gmra.mxu0 %v640
      %v665 = vpop.f32.mrf.mxu0
      %v666 = vadd.f32 0.0, %v665
      %667 = vdwg.mxu0
      %668 = vmatpush.msra.mxu0 0.0
      %669 = vmatpush.msra.mxu0 0.0
      %670 = vmatpush.msra.mxu0 0.0
      %671 = vmatpush.msra.mxu0 0.0
      %672 = vmatpush.msra.mxu0 0.0
      %673 = vmatpush.msra.mxu0 0.0
      %674 = vmatpush.msra.mxu0 0.0
      %675 = vmatpush.msra.mxu0 0.0
      %676 = vmatpush.msra.mxu0 0.0
      %677 = vmatpush.msra.mxu0 0.0
      %678 = vmatpush.msra.mxu0 0.0
      %679 = vmatpush.msra.mxu0 0.0
      %680 = vmatpush.msra.mxu0 0.0
      %681 = vmatpush.msra.mxu0 0.0
      %682 = vmatpush.msra.mxu0 0.0
      %683 = vmatpush.msra.mxu0 %v644
      %684 = vmatmul.f32.gmra.mxu0 %v640
      %v685 = vpop.f32.mrf.mxu0
      %v686 = vadd.f32 0.0, %v685
      %687 = vdwg.mxu0
      %688 = vmatpush.msra.mxu0 0.0
      %689 = vmatpush.msra.mxu0 0.0
      %690 = vmatpush.msra.mxu0 0.0
      %691 = vmatpush.msra.mxu0 0.0
      %692 = vmatpush.msra.mxu0 0.0
      %693 = vmatpush.msra.mxu0 0.0
      %694 = vmatpush.msra.mxu0 0.0
      %695 = vmatpush.msra.mxu0 0.0
      %696 = vmatpush.msra.mxu0 0.0
      %697 = vmatpush.msra.mxu0 0.0
      %698 = vmatpush.msra.mxu0 0.0
      %699 = vmatpush.msra.mxu0 0.0
      %700 = vmatpush.msra.mxu0 0.0
      %701 = vmatpush.msra.mxu0 0.0
      %702 = vmatpush.msra.mxu0 0.0
      %703 = vmatpush.msra.mxu0 %v646
      %704 = vmatmul.f32.gmra.mxu0 %v640
      %v705 = vpop.f32.mrf.mxu0
      %v706 = vadd.f32 0.0, %v705
      %707 = vdwg.mxu0
      %v708 = vadd.f32 %v615, %v666
      %v709 = vadd.f32 %v616, %v686
      %v710 = vadd.f32 %v617, %v706
      %v711 = vld [vmem:[%s165] sm:$0xff]
      %v712 = vld [vmem:[%s165 + $0x8] sm:$0xf]
      %s713 = scalar_lea.vmem %s1, 48
      %v714 = vld [vmem:[%s713] sm:$0xff]
      %717 = vst [vmem:[#allocation1] ss:$2 sm:$0xff] %v711
      %s718 = scalar_lea.vmem [#allocation1], 16
      %719 = vst [vmem:[%s718] ss:$2 sm:$0xff] %v712
      %v720 = vld.sshfl [vmem:[#allocation1] sm:$0xff pattern:$0x75316420]
      %v721 = vld.sshfl [vmem:[#allocation1 + $0x8] sm:$0xff pattern:$0x75316420]
      %v722 = vld.sshfl [vmem:[#allocation1 + $0x10] sm:$0xff pattern:$0x75316420]
      %723 = vrot.lane.b32.xlu0 %v720, 92
      %v724 = vpop.permute.xlu0 %723
      %725 = vrot.lane.b32.xlu0 %v721, 92
      %v726 = vpop.permute.xlu0 %725
      %727 = vrot.lane.b32.xlu0 %v722, 92
      %v728 = vpop.permute.xlu0 %727
      %vm729 = vcmask 752640
      %v730 = vsel %vm729, %v724, %v726
      %v731 = vsel %vm729, %v726, %v728
      %v733 = vsel %vm193, %v714, 0
      %v735 = vsel %vm197, %v730, 0
      %v737 = vsel %vm197, %v731, 0
      %v739 = vsel %vm197, %v728, 0
      %741 = vmatpush.msra.mxu0 0.0
      %742 = vmatpush.msra.mxu0 0.0
      %743 = vmatpush.msra.mxu0 0.0
      %744 = vmatpush.msra.mxu0 0.0
      %745 = vmatpush.msra.mxu0 0.0
      %746 = vmatpush.msra.mxu0 0.0
      %747 = vmatpush.msra.mxu0 0.0
      %748 = vmatpush.msra.mxu0 0.0
      %749 = vmatpush.msra.mxu0 0.0
      %750 = vmatpush.msra.mxu0 0.0
      %751 = vmatpush.msra.mxu0 0.0
      %752 = vmatpush.msra.mxu0 0.0
      %753 = vmatpush.msra.mxu0 0.0
      %754 = vmatpush.msra.mxu0 0.0
      %755 = vmatpush.msra.mxu0 0.0
      %756 = vmatpush.msra.mxu0 %v735
      %757 = vmatmul.f32.gmra.mxu0 %v733
      %v758 = vpop.f32.mrf.mxu0
      %v759 = vadd.f32 0.0, %v758
      %760 = vdwg.mxu0
      %761 = vmatpush.msra.mxu0 0.0
      %762 = vmatpush.msra.mxu0 0.0
      %763 = vmatpush.msra.mxu0 0.0
      %764 = vmatpush.msra.mxu0 0.0
      %765 = vmatpush.msra.mxu0 0.0
      %766 = vmatpush.msra.mxu0 0.0
      %767 = vmatpush.msra.mxu0 0.0
      %768 = vmatpush.msra.mxu0 0.0
      %769 = vmatpush.msra.mxu0 0.0
      %770 = vmatpush.msra.mxu0 0.0
      %771 = vmatpush.msra.mxu0 0.0
      %772 = vmatpush.msra.mxu0 0.0
      %773 = vmatpush.msra.mxu0 0.0
      %774 = vmatpush.msra.mxu0 0.0
      %775 = vmatpush.msra.mxu0 0.0
      %776 = vmatpush.msra.mxu0 %v737
      %777 = vmatmul.f32.gmra.mxu0 %v733
      %v778 = vpop.f32.mrf.mxu0
      %v779 = vadd.f32 0.0, %v778
      %780 = vdwg.mxu0
      %781 = vmatpush.msra.mxu0 0.0
      %782 = vmatpush.msra.mxu0 0.0
      %783 = vmatpush.msra.mxu0 0.0
      %784 = vmatpush.msra.mxu0 0.0
      %785 = vmatpush.msra.mxu0 0.0
      %786 = vmatpush.msra.mxu0 0.0
      %787 = vmatpush.msra.mxu0 0.0
      %788 = vmatpush.msra.mxu0 0.0
      %789 = vmatpush.msra.mxu0 0.0
      %790 = vmatpush.msra.mxu0 0.0
      %791 = vmatpush.msra.mxu0 0.0
      %792 = vmatpush.msra.mxu0 0.0
      %793 = vmatpush.msra.mxu0 0.0
      %794 = vmatpush.msra.mxu0 0.0
      %795 = vmatpush.msra.mxu0 0.0
      %796 = vmatpush.msra.mxu0 %v739
      %797 = vmatmul.f32.gmra.mxu0 %v733
      %v798 = vpop.f32.mrf.mxu0
      %v799 = vadd.f32 0.0, %v798
      %800 = vdwg.mxu0
      %v801 = vadd.f32 %v708, %v759
      %v802 = vadd.f32 %v709, %v779
      %v803 = vadd.f32 %v710, %v799
      %v804 = vld [vmem:[%s165] sm:$0xff]
      %v805 = vld [vmem:[%s165 + $0x8] sm:$0xf]
      %s806 = scalar_lea.vmem %s1, 56
      %v807 = vld [vmem:[%s806] sm:$0xff]
      %810 = vst [vmem:[#allocation1] ss:$2 sm:$0xff] %v804
      %s811 = scalar_lea.vmem [#allocation1], 16
      %812 = vst [vmem:[%s811] ss:$2 sm:$0xff] %v805
      %v813 = vld.sshfl [vmem:[#allocation1] sm:$0xff pattern:$0x75316420]
      %v814 = vld.sshfl [vmem:[#allocation1 + $0x8] sm:$0xff pattern:$0x75316420]
      %v815 = vld.sshfl [vmem:[#allocation1 + $0x10] sm:$0xff pattern:$0x75316420]
      %816 = vrot.lane.b32.xlu0 %v813, 91
      %v817 = vpop.permute.xlu0 %816
      %818 = vrot.lane.b32.xlu0 %v814, 91
      %v819 = vpop.permute.xlu0 %818
      %820 = vrot.lane.b32.xlu0 %v815, 91
      %v821 = vpop.permute.xlu0 %820
      %vm822 = vcmask 744448
      %v823 = vsel %vm822, %v817, %v819
      %v824 = vsel %vm822, %v819, %v821
      %v826 = vsel %vm193, %v807, 0
      %v828 = vsel %vm197, %v823, 0
      %v830 = vsel %vm197, %v824, 0
      %v832 = vsel %vm197, %v821, 0
      %834 = vmatpush.msra.mxu0 0.0
      %835 = vmatpush.msra.mxu0 0.0
      %836 = vmatpush.msra.mxu0 0.0
      %837 = vmatpush.msra.mxu0 0.0
      %838 = vmatpush.msra.mxu0 0.0
      %839 = vmatpush.msra.mxu0 0.0
      %840 = vmatpush.msra.mxu0 0.0
      %841 = vmatpush.msra.mxu0 0.0
      %842 = vmatpush.msra.mxu0 0.0
      %843 = vmatpush.msra.mxu0 0.0
      %844 = vmatpush.msra.mxu0 0.0
      %845 = vmatpush.msra.mxu0 0.0
      %846 = vmatpush.msra.mxu0 0.0
      %847 = vmatpush.msra.mxu0 0.0
      %848 = vmatpush.msra.mxu0 0.0
      %849 = vmatpush.msra.mxu0 %v828
      %850 = vmatmul.f32.gmra.mxu0 %v826
      %v851 = vpop.f32.mrf.mxu0
      %v852 = vadd.f32 0.0, %v851
      %853 = vdwg.mxu0
      %854 = vmatpush.msra.mxu0 0.0
      %855 = vmatpush.msra.mxu0 0.0
      %856 = vmatpush.msra.mxu0 0.0
      %857 = vmatpush.msra.mxu0 0.0
      %858 = vmatpush.msra.mxu0 0.0
      %859 = vmatpush.msra.mxu0 0.0
      %860 = vmatpush.msra.mxu0 0.0
      %861 = vmatpush.msra.mxu0 0.0
      %862 = vmatpush.msra.mxu0 0.0
      %863 = vmatpush.msra.mxu0 0.0
      %864 = vmatpush.msra.mxu0 0.0
      %865 = vmatpush.msra.mxu0 0.0
      %866 = vmatpush.msra.mxu0 0.0
      %867 = vmatpush.msra.mxu0 0.0
      %868 = vmatpush.msra.mxu0 0.0
      %869 = vmatpush.msra.mxu0 %v830
      %870 = vmatmul.f32.gmra.mxu0 %v826
      %v871 = vpop.f32.mrf.mxu0
      %v872 = vadd.f32 0.0, %v871
      %873 = vdwg.mxu0
      %874 = vmatpush.msra.mxu0 0.0
      %875 = vmatpush.msra.mxu0 0.0
      %876 = vmatpush.msra.mxu0 0.0
      %877 = vmatpush.msra.mxu0 0.0
      %878 = vmatpush.msra.mxu0 0.0
      %879 = vmatpush.msra.mxu0 0.0
      %880 = vmatpush.msra.mxu0 0.0
      %881 = vmatpush.msra.mxu0 0.0
      %882 = vmatpush.msra.mxu0 0.0
      %883 = vmatpush.msra.mxu0 0.0
      %884 = vmatpush.msra.mxu0 0.0
      %885 = vmatpush.msra.mxu0 0.0
      %886 = vmatpush.msra.mxu0 0.0
      %887 = vmatpush.msra.mxu0 0.0
      %888 = vmatpush.msra.mxu0 0.0
      %889 = vmatpush.msra.mxu0 %v832
      %890 = vmatmul.f32.gmra.mxu0 %v826
      %v891 = vpop.f32.mrf.mxu0
      %v892 = vadd.f32 0.0, %v891
      %893 = vdwg.mxu0
      %v894 = vadd.f32 %v801, %v852
      %v895 = vadd.f32 %v802, %v872
      %v896 = vadd.f32 %v803, %v892
      %v897 = vld [vmem:[%s165] sm:$0xff]
      %v898 = vld [vmem:[%s165 + $0x8] sm:$0xf]
      %s899 = scalar_lea.vmem %s1, 64
      %v900 = vld [vmem:[%s899] sm:$0xff]
      %903 = vst [vmem:[#allocation1] ss:$2 sm:$0xff] %v897
      %s904 = scalar_lea.vmem [#allocation1], 16
      %905 = vst [vmem:[%s904] ss:$2 sm:$0xff] %v898
      %v906 = vld.sshfl [vmem:[#allocation1] sm:$0xff pattern:$0x75316420]
      %v907 = vld.sshfl [vmem:[#allocation1 + $0x8] sm:$0xff pattern:$0x75316420]
      %v908 = vld.sshfl [vmem:[#allocation1 + $0x10] sm:$0xff pattern:$0x75316420]
      %909 = vrot.lane.b32.xlu0 %v906, 90
      %v910 = vpop.permute.xlu0 %909
      %911 = vrot.lane.b32.xlu0 %v907, 90
      %v912 = vpop.permute.xlu0 %911
      %913 = vrot.lane.b32.xlu0 %v908, 90
      %v914 = vpop.permute.xlu0 %913
      %vm915 = vcmask 736256
      %v916 = vsel %vm915, %v910, %v912
      %v917 = vsel %vm915, %v912, %v914
      %v919 = vsel %vm193, %v900, 0
      %v921 = vsel %vm197, %v916, 0
      %v923 = vsel %vm197, %v917, 0
      %v925 = vsel %vm197, %v914, 0
      %927 = vmatpush.msra.mxu0 0.0
      %928 = vmatpush.msra.mxu0 0.0
      %929 = vmatpush.msra.mxu0 0.0
      %930 = vmatpush.msra.mxu0 0.0
      %931 = vmatpush.msra.mxu0 0.0
      %932 = vmatpush.msra.mxu0 0.0
      %933 = vmatpush.msra.mxu0 0.0
      %934 = vmatpush.msra.mxu0 0.0
      %935 = vmatpush.msra.mxu0 0.0
      %936 = vmatpush.msra.mxu0 0.0
      %937 = vmatpush.msra.mxu0 0.0
      %938 = vmatpush.msra.mxu0 0.0
      %939 = vmatpush.msra.mxu0 0.0
      %940 = vmatpush.msra.mxu0 0.0
      %941 = vmatpush.msra.mxu0 0.0
      %942 = vmatpush.msra.mxu0 %v921
      %943 = vmatmul.f32.gmra.mxu0 %v919
      %v944 = vpop.f32.mrf.mxu0
      %v945 = vadd.f32 0.0, %v944
      %946 = vdwg.mxu0
      %947 = vmatpush.msra.mxu0 0.0
      %948 = vmatpush.msra.mxu0 0.0
      %949 = vmatpush.msra.mxu0 0.0
      %950 = vmatpush.msra.mxu0 0.0
      %951 = vmatpush.msra.mxu0 0.0
      %952 = vmatpush.msra.mxu0 0.0
      %953 = vmatpush.msra.mxu0 0.0
      %954 = vmatpush.msra.mxu0 0.0
      %955 = vmatpush.msra.mxu0 0.0
      %956 = vmatpush.msra.mxu0 0.0
      %957 = vmatpush.msra.mxu0 0.0
      %958 = vmatpush.msra.mxu0 0.0
      %959 = vmatpush.msra.mxu0 0.0
      %960 = vmatpush.msra.mxu0 0.0
      %961 = vmatpush.msra.mxu0 0.0
      %962 = vmatpush.msra.mxu0 %v923
      %963 = vmatmul.f32.gmra.mxu0 %v919
      %v964 = vpop.f32.mrf.mxu0
      %v965 = vadd.f32 0.0, %v964
      %966 = vdwg.mxu0
      %967 = vmatpush.msra.mxu0 0.0
      %968 = vmatpush.msra.mxu0 0.0
      %969 = vmatpush.msra.mxu0 0.0
      %970 = vmatpush.msra.mxu0 0.0
      %971 = vmatpush.msra.mxu0 0.0
      %972 = vmatpush.msra.mxu0 0.0
      %973 = vmatpush.msra.mxu0 0.0
      %974 = vmatpush.msra.mxu0 0.0
      %975 = vmatpush.msra.mxu0 0.0
      %976 = vmatpush.msra.mxu0 0.0
      %977 = vmatpush.msra.mxu0 0.0
      %978 = vmatpush.msra.mxu0 0.0
      %979 = vmatpush.msra.mxu0 0.0
      %980 = vmatpush.msra.mxu0 0.0
      %981 = vmatpush.msra.mxu0 0.0
      %982 = vmatpush.msra.mxu0 %v925
      %983 = vmatmul.f32.gmra.mxu0 %v919
      %v984 = vpop.f32.mrf.mxu0
      %v985 = vadd.f32 0.0, %v984
      %986 = vdwg.mxu0
      %v987 = vadd.f32 %v894, %v945
      %v988 = vadd.f32 %v895, %v965
      %v989 = vadd.f32 %v896, %v985
      %v990 = vld [vmem:[%s2] sm:$0xff]
      %992 = vset.pattern.permute.xlu0 0
      %993 = vperm.xlu0 %992, %v990
      %v994 = vpop.permute.xlu0 %993
      %v996 = vmul.f32 %v987, %v994
      %v997 = vmul.f32 %v988, %v994
      %v998 = vmul.f32 %v989, %v994
      %999 = vset.pattern.permute.xlu0 1
      %1000 = vperm.xlu0 %999, %v990
      %v1001 = vpop.permute.xlu0 %1000
      %v1003 = vadd.f32 %v996, %v1001
      %v1004 = vadd.f32 %v997, %v1001
      %v1005 = vadd.f32 %v998, %v1001
      %v1006 = vsub.f32 0.0, %v1003
      %v1007 = vsub.f32 0.0, %v1004
      %v1008 = vsub.f32 0.0, %v1005
      %v1009 = vmul.f32 %v1006, 1.442695
      %v1010 = vpow.pop %v1009
      %v1011 = vmul.f32 %v1007, 1.442695
      %v1012 = vpow.pop %v1011
      %v1013 = vmul.f32 %v1008, 1.442695
      %v1014 = vpow.pop %v1013
      %v1015 = vadd.f32 %v1010, 1.0
      %v1016 = vadd.f32 %v1012, 1.0
      %v1017 = vadd.f32 %v1014, 1.0
      %v1018 = vrcp.pop %v1015
      %v1019 = vmul.f32 %v1015, %v1018
      %v1020 = vsub.f32 1.0, %v1019
      %v1021 = vmul.f32 %v1018, %v1020
      %v1022 = vadd.f32 %v1018, %v1021
      %vm1023 = vweird.f32 %v1015
      %vm1024 = vweird.f32 %v1018
      %vm1025 = vmor %vm1023, %vm1024
      %v1026 = vsel %vm1025, %v1018, %v1022
      %v1027 = vand.u32 2147483647, %v1015
      %vm1028 = vcmp.eq.f32.partialorder %v1027, 8.507059e+37
      %v1029 = vand.u32 %v1015, 2147483648
      %v1030 = vor.u32 1.1754944e-38, %v1029
      %v1031 = vsel %vm1028, %v1030, %v1026
      %v1032 = vmul.f32 %v1003, %v1031
      %v1033 = vrcp.pop %v1016
      %v1034 = vmul.f32 %v1016, %v1033
      %v1035 = vsub.f32 1.0, %v1034
      %v1036 = vmul.f32 %v1033, %v1035
      %v1037 = vadd.f32 %v1033, %v1036
      %vm1038 = vweird.f32 %v1016
      %vm1039 = vweird.f32 %v1033
      %vm1040 = vmor %vm1038, %vm1039
      %v1041 = vsel %vm1040, %v1033, %v1037
      %v1042 = vand.u32 2147483647, %v1016
      %vm1043 = vcmp.eq.f32.partialorder %v1042, 8.507059e+37
      %v1044 = vand.u32 %v1016, 2147483648
      %v1045 = vor.u32 1.1754944e-38, %v1044
      %v1046 = vsel %vm1043, %v1045, %v1041
      %v1047 = vmul.f32 %v1004, %v1046
      %v1048 = vrcp.pop %v1017
      %v1049 = vmul.f32 %v1017, %v1048
      %v1050 = vsub.f32 1.0, %v1049
      %v1051 = vmul.f32 %v1048, %v1050
      %v1052 = vadd.f32 %v1048, %v1051
      %vm1053 = vweird.f32 %v1017
      %vm1054 = vweird.f32 %v1048
      %vm1055 = vmor %vm1053, %vm1054
      %v1056 = vsel %vm1055, %v1048, %v1052
      %v1057 = vand.u32 2147483647, %v1017
      %vm1058 = vcmp.eq.f32.partialorder %v1057, 8.507059e+37
      %v1059 = vand.u32 %v1017, 2147483648
      %v1060 = vor.u32 1.1754944e-38, %v1059
      %v1061 = vsel %vm1058, %v1060, %v1056
      %v1062 = vmul.f32 %v1005, %v1061
      %1063 = vst [vmem:[%s170] sm:$0xff] %v1032
      %1064 = vst [vmem:[%s170 + $0x8] sm:$0xff] %v1047
      %vm1065 = vcmask 261120
      %1066 = vst.msk [vmem:[%s170 + $0x10] sm:$0xff] %vm1065, %v1062
      %p1067 = scmp.lt.s32.totalorder %s14, 1
      %s1068 = scalar_select %p1067, %s14, 1
      %s1069 = smul.addr %s1068, 3
      %s1070 = smul.addr %s1069, 8
      %s1071 = scalar_lea.vmem %s3, %s1070
      // Predicated region
      $region33: #{fdconv_forward.3} parent=31 // pred_check
        %p1072 = pneg %p100
      $region34: #{fdconv_forward.3} parent=31 // pred_check_branch
        %1074 = sbr.rel (%p1072) target = $region36
      $region35: #{fdconv_forward.3} parent=31 // pred_region
        _
      $region36: #{fdconv_forward.3} parent=31 // pred_fallthru
        _
    $region32: #{fdconv_forward.3} parent=5 // pred_fallthru
      _
    %p1075 = scmp.le.s32.totalorder 2, %s9
    // Predicated region
    $region37: #{fdconv_forward.3} parent=5 // pred_check
      %p1076 = pneg %p1075
    $region38: #{fdconv_forward.3} parent=5 // pred_check_branch
      %1078 = sbr.rel (%p1076) target = $region40
    $region39: #{fdconv_forward.3} parent=5 // pred_region
      %s1079 = ssub.s32 %s9, 2
      // Predicated region
      $region41: #{fdconv_forward.3} parent=39 // pred_check
        %p1080 = pneg %p106
      $region42: #{fdconv_forward.3} parent=39 // pred_check_branch
        %1082 = sbr.rel (%p1080) target = $region44
      $region43: #{fdconv_forward.3} parent=39 // pred_region
        %p1083 = scmp.lt.s32.totalorder %s15, 1
        %s1084 = scalar_select %p1083, %s15, 1
        %s1085 = smul.addr %s1084, 3
        %s1086 = smul.addr %s1085, 8
        %s1087 = scalar_lea.vmem %s3, %s1086
      $region44: #{fdconv_forward.3} parent=39 // pred_fallthru
        _
    $region40: #{fdconv_forward.3} parent=5 // pred_fallthru
      _
  $region6: #{fdconv_forward.3} parent=0 // loop_footer
    %s13 = sadd.s32 1, %s9
  $region7: #{fdconv_forward.3} parent=0 // loop_footer_branch
    %8 = sbr.rel target = $region3
  $region8: #{fdconv_forward.3} parent=0 // loop_exit
    _

</llo_original>
